<compile_context>
chip_gen: v7x
topology: tpu7x:2x2x1
jax: 0.10.0
libtpu: 0.0.40
codegen_flags: <defaults>
</compile_context>

<pallas_src>
import functools

import jax
import jax.numpy as jnp
from jax import lax
from jax.experimental import pallas as pl
from jax.experimental.pallas import tpu as pltpu


# ----------------------------- Pallas kernel ------------------------------ #
def _conv_act_kernel(w_ref, x_ref, b_ref, out_ref, patch_ref,
                     *, k, C_pad, HW, W, P, T, Kp):
    # w_ref:     (C_out, Kp)       weights, column r = C_pad*t + c  (tap-major)
    # x_ref:     (C_pad, DHW_pad)  one sample's input slab, zero-padded
    # b_ref:     (C_out, 2)        [:,0] = conv bias, [:,1] = extra bias
    # out_ref:   (C_out, P)        lane-dense output tile (flattened spatial)
    # patch_ref: (Kp, P)           VMEM scratch: in-kernel im2col patch matrix
    #
    # Build the patch matrix from the resident slab with statically shifted
    # lane slices:  patch[C_pad*t + c, p] = x[c, p + kd*H*W + kh*W + kw]
    t = 0
    for kd in range(k):
        for kh in range(k):
            for kw in range(k):
                off = kd * HW + kh * W + kw
                patch_ref[pl.ds(C_pad * t, C_pad), :] = x_ref[:, pl.ds(off, P)]
                t += 1
    # Zero the padded tail rows so the fully-aligned matmul below is exact.
    tail = Kp - C_pad * T
    if tail > 0:
        patch_ref[pl.ds(C_pad * T, tail), :] = jnp.zeros((tail, P), jnp.float32)

    y = jnp.dot(w_ref[...], patch_ref[...], preferred_element_type=jnp.float32)
    y = y + b_ref[:, 0:1]                        # conv bias
    y = jnp.maximum(y, 0.0)                      # ReLU (LeakyReLU after ReLU is a no-op)
    # GELU (exact, erf-based -- matches torch.nn.functional.gelu default)
    y = 0.5 * y * (1.0 + lax.erf(y * 0.7071067811865476))
    # Sigmoid via EUP tanh: sigmoid(y) = 0.5 * (1 + tanh(y / 2))
    y = 0.5 * (1.0 + jnp.tanh(0.5 * y))
    y = y + b_ref[:, 1:2]                        # extra per-channel bias
    out_ref[...] = y.astype(out_ref.dtype)


# ------------------------------- wrapper ----------------------------------- #
@jax.jit
def conv3d_act_bias(x, conv_weight, conv_bias, bias):
    """x: (N, C_in, D, H, W); conv_weight: (C_out, C_in, k, k, k);
    conv_bias: (C_out,); bias: (C_out, 1, 1, 1).  Returns (N, C_out, Do, Ho, Wo)."""
    N, C_in, D, H, W = x.shape
    C_out, _, k, _, _ = conv_weight.shape
    Do, Ho, Wo = D - k + 1, H - k + 1, W - k + 1
    HW = H * W
    DHW = D * HW
    T = k * k * k

    C_pad = pl.cdiv(C_in, 8) * 8                    # sublane-align channels
    Kp = pl.cdiv(T * C_pad, 128) * 128              # contraction padded to 128
    P_valid = Do * HW                               # valid flattened extent
    P = pl.cdiv(P_valid, 128) * 128                 # lane-dense output tile
    max_off = (k - 1) * (HW + W + 1)                # largest tap shift
    DHW_pad = pl.cdiv(P + max_off, 128) * 128       # so shifted reads stay in-bounds

    # Flattened per-sample slab (read exactly once by the kernel).
    x_flat = x.reshape(N, C_in, DHW).astype(jnp.float32)
    x_flat = jnp.pad(x_flat, ((0, 0), (0, C_pad - C_in), (0, DHW_pad - DHW)))

    # Weight matrix: column index C_pad*t + c  (tap-major, channel-minor),
    # matching the in-kernel patch layout; zero-pad contraction to Kp.
    w_pad = jnp.pad(conv_weight.astype(jnp.float32),
                    ((0, 0), (0, C_pad - C_in), (0, 0), (0, 0), (0, 0)))
    w_mat = w_pad.transpose(2, 3, 4, 1, 0).reshape(T * C_pad, C_out).T
    w_mat = jnp.pad(w_mat, ((0, 0), (0, Kp - T * C_pad)))

    # Pack both per-channel biases into one operand -> one DMA stream.
    b_packed = jnp.stack(
        [conv_bias.astype(jnp.float32), bias.reshape(C_out).astype(jnp.float32)],
        axis=1)                                      # (C_out, 2)

    kernel = functools.partial(_conv_act_kernel, k=k, C_pad=C_pad, HW=HW, W=W,
                               P=P, T=T, Kp=Kp)

    out = pl.pallas_call(
        kernel,
        out_shape=jax.ShapeDtypeStruct((N, C_out, P), jnp.float32),
        grid_spec=pltpu.PrefetchScalarGridSpec(
            num_scalar_prefetch=0,
            grid=(N,),
            in_specs=[
                pl.BlockSpec((C_out, Kp), lambda n: (0, 0)),
                pl.BlockSpec((None, C_pad, DHW_pad), lambda n: (n, 0, 0)),
                pl.BlockSpec((C_out, 2), lambda n: (0, 0)),
            ],
            out_specs=pl.BlockSpec((None, C_out, P), lambda n: (n, 0, 0)),
            scratch_shapes=[pltpu.VMEM((Kp, P), jnp.float32)],
        ),
        compiler_params=pltpu.CompilerParams(
            dimension_semantics=("parallel",)),
    )(w_mat, x_flat, b_packed)

    # (N, C_out, P) -> slice valid flattened positions -> (N, C_out, Do, H, W)
    # -> drop the H/W halo columns. No XLA transpose over the output.
    out = out[:, :, :P_valid].reshape(N, C_out, Do, H, W)[:, :, :, :Ho, :Wo]
    return out


# ------------------------------ reference ---------------------------------- #
def _reference(x, conv_weight, conv_bias, bias):
    y = lax.conv_general_dilated(
        x, conv_weight, window_strides=(1, 1, 1), padding="VALID",
        dimension_numbers=("NCDHW", "OIDHW", "NCDHW"))
    y = y + conv_bias.reshape(1, -1, 1, 1, 1)
    y = jnp.maximum(y, 0.0)
    y = jnp.where(y >= 0.0, y, 0.01 * y)
    y = 0.5 * y * (1.0 + lax.erf(y / jnp.sqrt(2.0)))
    y = jax.nn.sigmoid(y)
    y = y + bias.reshape(1, -1, 1, 1, 1)
    return y


if __name__ == "__main__":
    in_channels, out_channels, kernel_size = 3, 16, 3
    N, D, H, W = 2, 8, 8, 8

    key = jax.random.PRNGKey(0)
    kx, kw, kb, ke = jax.random.split(key, 4)

    x = jax.random.normal(kx, (N, in_channels, D, H, W), dtype=jnp.float32)

    # Deterministic "PyTorch-like" init: uniform(-1/sqrt(fan_in), 1/sqrt(fan_in))
    fan_in = in_channels * kernel_size ** 3
    bound = 1.0 / jnp.sqrt(fan_in)
    conv_weight = jax.random.uniform(
        kw, (out_channels, in_channels, kernel_size, kernel_size, kernel_size),
        minval=-bound, maxval=bound, dtype=jnp.float32)
    conv_bias = jax.random.uniform(
        kb, (out_channels,), minval=-bound, maxval=bound, dtype=jnp.float32)
    bias = 0.02 * jax.random.normal(ke, (out_channels, 1, 1, 1), dtype=jnp.float32)

    out = conv3d_act_bias(x, conv_weight, conv_bias, bias)
    out = jax.block_until_ready(out)

    ref = _reference(x, conv_weight, conv_bias, bias)
    assert out.shape == (N, out_channels, D - 2, H - 2, W - 2), out.shape
    assert jnp.allclose(out, ref, atol=1e-4, rtol=1e-4), float(
        jnp.max(jnp.abs(out - ref)))

    print("KERNEL_OK")
</pallas_src>

<mosaic_0001>
module attributes {stable_mosaic.version = 11 : i64} {
  func.func @_conv_act_kernel(%arg0: i32, %arg1: memref<16x256xf32, #tpu.memory_space<vmem>>, %arg2: memref<1x8x640xf32, #tpu.memory_space<vmem>>, %arg3: memref<16x2xf32, #tpu.memory_space<vmem>>, %arg4: memref<1x16x384xf32, #tpu.memory_space<vmem>>, %arg5: memref<256x384xf32, #tpu.memory_space<vmem>>) attributes {dimension_semantics = [#tpu.dimension_semantics<parallel>], iteration_bounds = array<i64: 2>, scalar_prefetch = 0 : i64, scratch_operands = 1 : i64, tpu.core_type = #tpu.core_type<tc>, window_params = [{pipeline_mode = #tpu.pipeline_mode<synchronous>, transform_indices = @transform_0, window_bounds = array<i64: 16, 256>}, {transform_indices = @transform_1, window_bounds = array<i64: 1, 8, 640>}, {pipeline_mode = #tpu.pipeline_mode<synchronous>, transform_indices = @transform_2, window_bounds = array<i64: 16, 2>}, {transform_indices = @transform_3, window_bounds = array<i64: 1, 16, 384>}]} {
    %c0 = arith.constant 0 : index
    %c0_0 = arith.constant 0 : index
    %c0_1 = arith.constant 0 : index
    %0 = vector.load %arg2[%c0, %c0_0, %c0_1] : memref<1x8x640xf32, #tpu.memory_space<vmem>>, vector<1x8x384xf32>
    %1 = vector.shape_cast %0 : vector<1x8x384xf32> to vector<8x384xf32>
    %c0_2 = arith.constant 0 : index
    %c0_3 = arith.constant 0 : index
    %2 = vector.load %arg5[%c0_2, %c0_3] : memref<256x384xf32, #tpu.memory_space<vmem>>, vector<8x384xf32>
    tpu.vector_store %arg5[%c0_2, %c0_3], %1 {strides = array<i32>} : memref<256x384xf32, #tpu.memory_space<vmem>>, vector<8x384xf32>,
    %c0_4 = arith.constant 0 : index
    %c0_5 = arith.constant 0 : index
    %c1 = arith.constant 1 : index
    %3 = vector.load %arg2[%c0_4, %c0_5, %c1] : memref<1x8x640xf32, #tpu.memory_space<vmem>>, vector<1x8x384xf32>
    %4 = vector.shape_cast %3 : vector<1x8x384xf32> to vector<8x384xf32>
    %c8 = arith.constant 8 : index
    %c0_6 = arith.constant 0 : index
    %5 = vector.load %arg5[%c8, %c0_6] : memref<256x384xf32, #tpu.memory_space<vmem>>, vector<8x384xf32>
    tpu.vector_store %arg5[%c8, %c0_6], %4 {strides = array<i32>} : memref<256x384xf32, #tpu.memory_space<vmem>>, vector<8x384xf32>,
    %c0_7 = arith.constant 0 : index
    %c0_8 = arith.constant 0 : index
    %c2 = arith.constant 2 : index
    %6 = vector.load %arg2[%c0_7, %c0_8, %c2] : memref<1x8x640xf32, #tpu.memory_space<vmem>>, vector<1x8x384xf32>
    %7 = vector.shape_cast %6 : vector<1x8x384xf32> to vector<8x384xf32>
    %c16 = arith.constant 16 : index
    %c0_9 = arith.constant 0 : index
    %8 = vector.load %arg5[%c16, %c0_9] : memref<256x384xf32, #tpu.memory_space<vmem>>, vector<8x384xf32>
    tpu.vector_store %arg5[%c16, %c0_9], %7 {strides = array<i32>} : memref<256x384xf32, #tpu.memory_space<vmem>>, vector<8x384xf32>,
    %c0_10 = arith.constant 0 : index
    %c0_11 = arith.constant 0 : index
    %c8_12 = arith.constant 8 : index
    %9 = vector.load %arg2[%c0_10, %c0_11, %c8_12] : memref<1x8x640xf32, #tpu.memory_space<vmem>>, vector<1x8x384xf32>
    %10 = vector.shape_cast %9 : vector<1x8x384xf32> to vector<8x384xf32>
    %c24 = arith.constant 24 : index
    %c0_13 = arith.constant 0 : index
    %11 = vector.load %arg5[%c24, %c0_13] : memref<256x384xf32, #tpu.memory_space<vmem>>, vector<8x384xf32>
    tpu.vector_store %arg5[%c24, %c0_13], %10 {strides = array<i32>} : memref<256x384xf32, #tpu.memory_space<vmem>>, vector<8x384xf32>,
    %c0_14 = arith.constant 0 : index
    %c0_15 = arith.constant 0 : index
    %c9 = arith.constant 9 : index
    %12 = vector.load %arg2[%c0_14, %c0_15, %c9] : memref<1x8x640xf32, #tpu.memory_space<vmem>>, vector<1x8x384xf32>
    %13 = vector.shape_cast %12 : vector<1x8x384xf32> to vector<8x384xf32>
    %c32 = arith.constant 32 : index
    %c0_16 = arith.constant 0 : index
    %14 = vector.load %arg5[%c32, %c0_16] : memref<256x384xf32, #tpu.memory_space<vmem>>, vector<8x384xf32>
    tpu.vector_store %arg5[%c32, %c0_16], %13 {strides = array<i32>} : memref<256x384xf32, #tpu.memory_space<vmem>>, vector<8x384xf32>,
    %c0_17 = arith.constant 0 : index
    %c0_18 = arith.constant 0 : index
    %c10 = arith.constant 10 : index
    %15 = vector.load %arg2[%c0_17, %c0_18, %c10] : memref<1x8x640xf32, #tpu.memory_space<vmem>>, vector<1x8x384xf32>
    %16 = vector.shape_cast %15 : vector<1x8x384xf32> to vector<8x384xf32>
    %c40 = arith.constant 40 : index
    %c0_19 = arith.constant 0 : index
    %17 = vector.load %arg5[%c40, %c0_19] : memref<256x384xf32, #tpu.memory_space<vmem>>, vector<8x384xf32>
    tpu.vector_store %arg5[%c40, %c0_19], %16 {strides = array<i32>} : memref<256x384xf32, #tpu.memory_space<vmem>>, vector<8x384xf32>,
    %c0_20 = arith.constant 0 : index
    %c0_21 = arith.constant 0 : index
    %c16_22 = arith.constant 16 : index
    %18 = vector.load %arg2[%c0_20, %c0_21, %c16_22] : memref<1x8x640xf32, #tpu.memory_space<vmem>>, vector<1x8x384xf32>
    %19 = vector.shape_cast %18 : vector<1x8x384xf32> to vector<8x384xf32>
    %c48 = arith.constant 48 : index
    %c0_23 = arith.constant 0 : index
    %20 = vector.load %arg5[%c48, %c0_23] : memref<256x384xf32, #tpu.memory_space<vmem>>, vector<8x384xf32>
    tpu.vector_store %arg5[%c48, %c0_23], %19 {strides = array<i32>} : memref<256x384xf32, #tpu.memory_space<vmem>>, vector<8x384xf32>,
    %c0_24 = arith.constant 0 : index
    %c0_25 = arith.constant 0 : index
    %c17 = arith.constant 17 : index
    %21 = vector.load %arg2[%c0_24, %c0_25, %c17] : memref<1x8x640xf32, #tpu.memory_space<vmem>>, vector<1x8x384xf32>
    %22 = vector.shape_cast %21 : vector<1x8x384xf32> to vector<8x384xf32>
    %c56 = arith.constant 56 : index
    %c0_26 = arith.constant 0 : index
    %23 = vector.load %arg5[%c56, %c0_26] : memref<256x384xf32, #tpu.memory_space<vmem>>, vector<8x384xf32>
    tpu.vector_store %arg5[%c56, %c0_26], %22 {strides = array<i32>} : memref<256x384xf32, #tpu.memory_space<vmem>>, vector<8x384xf32>,
    %c0_27 = arith.constant 0 : index
    %c0_28 = arith.constant 0 : index
    %c18 = arith.constant 18 : index
    %24 = vector.load %arg2[%c0_27, %c0_28, %c18] : memref<1x8x640xf32, #tpu.memory_space<vmem>>, vector<1x8x384xf32>
    %25 = vector.shape_cast %24 : vector<1x8x384xf32> to vector<8x384xf32>
    %c64 = arith.constant 64 : index
    %c0_29 = arith.constant 0 : index
    %26 = vector.load %arg5[%c64, %c0_29] : memref<256x384xf32, #tpu.memory_space<vmem>>, vector<8x384xf32>
    tpu.vector_store %arg5[%c64, %c0_29], %25 {strides = array<i32>} : memref<256x384xf32, #tpu.memory_space<vmem>>, vector<8x384xf32>,
    %c0_30 = arith.constant 0 : index
    %c0_31 = arith.constant 0 : index
    %c64_32 = arith.constant 64 : index
    %27 = vector.load %arg2[%c0_30, %c0_31, %c64_32] : memref<1x8x640xf32, #tpu.memory_space<vmem>>, vector<1x8x384xf32>
    %28 = vector.shape_cast %27 : vector<1x8x384xf32> to vector<8x384xf32>
    %c72 = arith.constant 72 : index
    %c0_33 = arith.constant 0 : index
    %29 = vector.load %arg5[%c72, %c0_33] : memref<256x384xf32, #tpu.memory_space<vmem>>, vector<8x384xf32>
    tpu.vector_store %arg5[%c72, %c0_33], %28 {strides = array<i32>} : memref<256x384xf32, #tpu.memory_space<vmem>>, vector<8x384xf32>,
    %c0_34 = arith.constant 0 : index
    %c0_35 = arith.constant 0 : index
    %c65 = arith.constant 65 : index
    %30 = vector.load %arg2[%c0_34, %c0_35, %c65] : memref<1x8x640xf32, #tpu.memory_space<vmem>>, vector<1x8x384xf32>
    %31 = vector.shape_cast %30 : vector<1x8x384xf32> to vector<8x384xf32>
    %c80 = arith.constant 80 : index
    %c0_36 = arith.constant 0 : index
    %32 = vector.load %arg5[%c80, %c0_36] : memref<256x384xf32, #tpu.memory_space<vmem>>, vector<8x384xf32>
    tpu.vector_store %arg5[%c80, %c0_36], %31 {strides = array<i32>} : memref<256x384xf32, #tpu.memory_space<vmem>>, vector<8x384xf32>,
    %c0_37 = arith.constant 0 : index
    %c0_38 = arith.constant 0 : index
    %c66 = arith.constant 66 : index
    %33 = vector.load %arg2[%c0_37, %c0_38, %c66] : memref<1x8x640xf32, #tpu.memory_space<vmem>>, vector<1x8x384xf32>
    %34 = vector.shape_cast %33 : vector<1x8x384xf32> to vector<8x384xf32>
    %c88 = arith.constant 88 : index
    %c0_39 = arith.constant 0 : index
    %35 = vector.load %arg5[%c88, %c0_39] : memref<256x384xf32, #tpu.memory_space<vmem>>, vector<8x384xf32>
    tpu.vector_store %arg5[%c88, %c0_39], %34 {strides = array<i32>} : memref<256x384xf32, #tpu.memory_space<vmem>>, vector<8x384xf32>,
    %c0_40 = arith.constant 0 : index
    %c0_41 = arith.constant 0 : index
    %c72_42 = arith.constant 72 : index
    %36 = vector.load %arg2[%c0_40, %c0_41, %c72_42] : memref<1x8x640xf32, #tpu.memory_space<vmem>>, vector<1x8x384xf32>
    %37 = vector.shape_cast %36 : vector<1x8x384xf32> to vector<8x384xf32>
    %c96 = arith.constant 96 : index
    %c0_43 = arith.constant 0 : index
    %38 = vector.load %arg5[%c96, %c0_43] : memref<256x384xf32, #tpu.memory_space<vmem>>, vector<8x384xf32>
    tpu.vector_store %arg5[%c96, %c0_43], %37 {strides = array<i32>} : memref<256x384xf32, #tpu.memory_space<vmem>>, vector<8x384xf32>,
    %c0_44 = arith.constant 0 : index
    %c0_45 = arith.constant 0 : index
    %c73 = arith.constant 73 : index
    %39 = vector.load %arg2[%c0_44, %c0_45, %c73] : memref<1x8x640xf32, #tpu.memory_space<vmem>>, vector<1x8x384xf32>
    %40 = vector.shape_cast %39 : vector<1x8x384xf32> to vector<8x384xf32>
    %c104 = arith.constant 104 : index
    %c0_46 = arith.constant 0 : index
    %41 = vector.load %arg5[%c104, %c0_46] : memref<256x384xf32, #tpu.memory_space<vmem>>, vector<8x384xf32>
    tpu.vector_store %arg5[%c104, %c0_46], %40 {strides = array<i32>} : memref<256x384xf32, #tpu.memory_space<vmem>>, vector<8x384xf32>,
    %c0_47 = arith.constant 0 : index
    %c0_48 = arith.constant 0 : index
    %c74 = arith.constant 74 : index
    %42 = vector.load %arg2[%c0_47, %c0_48, %c74] : memref<1x8x640xf32, #tpu.memory_space<vmem>>, vector<1x8x384xf32>
    %43 = vector.shape_cast %42 : vector<1x8x384xf32> to vector<8x384xf32>
    %c112 = arith.constant 112 : index
    %c0_49 = arith.constant 0 : index
    %44 = vector.load %arg5[%c112, %c0_49] : memref<256x384xf32, #tpu.memory_space<vmem>>, vector<8x384xf32>
    tpu.vector_store %arg5[%c112, %c0_49], %43 {strides = array<i32>} : memref<256x384xf32, #tpu.memory_space<vmem>>, vector<8x384xf32>,
    %c0_50 = arith.constant 0 : index
    %c0_51 = arith.constant 0 : index
    %c80_52 = arith.constant 80 : index
    %45 = vector.load %arg2[%c0_50, %c0_51, %c80_52] : memref<1x8x640xf32, #tpu.memory_space<vmem>>, vector<1x8x384xf32>
    %46 = vector.shape_cast %45 : vector<1x8x384xf32> to vector<8x384xf32>
    %c120 = arith.constant 120 : index
    %c0_53 = arith.constant 0 : index
    %47 = vector.load %arg5[%c120, %c0_53] : memref<256x384xf32, #tpu.memory_space<vmem>>, vector<8x384xf32>
    tpu.vector_store %arg5[%c120, %c0_53], %46 {strides = array<i32>} : memref<256x384xf32, #tpu.memory_space<vmem>>, vector<8x384xf32>,
    %c0_54 = arith.constant 0 : index
    %c0_55 = arith.constant 0 : index
    %c81 = arith.constant 81 : index
    %48 = vector.load %arg2[%c0_54, %c0_55, %c81] : memref<1x8x640xf32, #tpu.memory_space<vmem>>, vector<1x8x384xf32>
    %49 = vector.shape_cast %48 : vector<1x8x384xf32> to vector<8x384xf32>
    %c128 = arith.constant 128 : index
    %c0_56 = arith.constant 0 : index
    %50 = vector.load %arg5[%c128, %c0_56] : memref<256x384xf32, #tpu.memory_space<vmem>>, vector<8x384xf32>
    tpu.vector_store %arg5[%c128, %c0_56], %49 {strides = array<i32>} : memref<256x384xf32, #tpu.memory_space<vmem>>, vector<8x384xf32>,
    %c0_57 = arith.constant 0 : index
    %c0_58 = arith.constant 0 : index
    %c82 = arith.constant 82 : index
    %51 = vector.load %arg2[%c0_57, %c0_58, %c82] : memref<1x8x640xf32, #tpu.memory_space<vmem>>, vector<1x8x384xf32>
    %52 = vector.shape_cast %51 : vector<1x8x384xf32> to vector<8x384xf32>
    %c136 = arith.constant 136 : index
    %c0_59 = arith.constant 0 : index
    %53 = vector.load %arg5[%c136, %c0_59] : memref<256x384xf32, #tpu.memory_space<vmem>>, vector<8x384xf32>
    tpu.vector_store %arg5[%c136, %c0_59], %52 {strides = array<i32>} : memref<256x384xf32, #tpu.memory_space<vmem>>, vector<8x384xf32>,
    %c0_60 = arith.constant 0 : index
    %c0_61 = arith.constant 0 : index
    %c128_62 = arith.constant 128 : index
    %54 = vector.load %arg2[%c0_60, %c0_61, %c128_62] : memref<1x8x640xf32, #tpu.memory_space<vmem>>, vector<1x8x384xf32>
    %55 = vector.shape_cast %54 : vector<1x8x384xf32> to vector<8x384xf32>
    %c144 = arith.constant 144 : index
    %c0_63 = arith.constant 0 : index
    %56 = vector.load %arg5[%c144, %c0_63] : memref<256x384xf32, #tpu.memory_space<vmem>>, vector<8x384xf32>
    tpu.vector_store %arg5[%c144, %c0_63], %55 {strides = array<i32>} : memref<256x384xf32, #tpu.memory_space<vmem>>, vector<8x384xf32>,
    %c0_64 = arith.constant 0 : index
    %c0_65 = arith.constant 0 : index
    %c129 = arith.constant 129 : index
    %57 = vector.load %arg2[%c0_64, %c0_65, %c129] : memref<1x8x640xf32, #tpu.memory_space<vmem>>, vector<1x8x384xf32>
    %58 = vector.shape_cast %57 : vector<1x8x384xf32> to vector<8x384xf32>
    %c152 = arith.constant 152 : index
    %c0_66 = arith.constant 0 : index
    %59 = vector.load %arg5[%c152, %c0_66] : memref<256x384xf32, #tpu.memory_space<vmem>>, vector<8x384xf32>
    tpu.vector_store %arg5[%c152, %c0_66], %58 {strides = array<i32>} : memref<256x384xf32, #tpu.memory_space<vmem>>, vector<8x384xf32>,
    %c0_67 = arith.constant 0 : index
    %c0_68 = arith.constant 0 : index
    %c130 = arith.constant 130 : index
    %60 = vector.load %arg2[%c0_67, %c0_68, %c130] : memref<1x8x640xf32, #tpu.memory_space<vmem>>, vector<1x8x384xf32>
    %61 = vector.shape_cast %60 : vector<1x8x384xf32> to vector<8x384xf32>
    %c160 = arith.constant 160 : index
    %c0_69 = arith.constant 0 : index
    %62 = vector.load %arg5[%c160, %c0_69] : memref<256x384xf32, #tpu.memory_space<vmem>>, vector<8x384xf32>
    tpu.vector_store %arg5[%c160, %c0_69], %61 {strides = array<i32>} : memref<256x384xf32, #tpu.memory_space<vmem>>, vector<8x384xf32>,
    %c0_70 = arith.constant 0 : index
    %c0_71 = arith.constant 0 : index
    %c136_72 = arith.constant 136 : index
    %63 = vector.load %arg2[%c0_70, %c0_71, %c136_72] : memref<1x8x640xf32, #tpu.memory_space<vmem>>, vector<1x8x384xf32>
    %64 = vector.shape_cast %63 : vector<1x8x384xf32> to vector<8x384xf32>
    %c168 = arith.constant 168 : index
    %c0_73 = arith.constant 0 : index
    %65 = vector.load %arg5[%c168, %c0_73] : memref<256x384xf32, #tpu.memory_space<vmem>>, vector<8x384xf32>
    tpu.vector_store %arg5[%c168, %c0_73], %64 {strides = array<i32>} : memref<256x384xf32, #tpu.memory_space<vmem>>, vector<8x384xf32>,
    %c0_74 = arith.constant 0 : index
    %c0_75 = arith.constant 0 : index
    %c137 = arith.constant 137 : index
    %66 = vector.load %arg2[%c0_74, %c0_75, %c137] : memref<1x8x640xf32, #tpu.memory_space<vmem>>, vector<1x8x384xf32>
    %67 = vector.shape_cast %66 : vector<1x8x384xf32> to vector<8x384xf32>
    %c176 = arith.constant 176 : index
    %c0_76 = arith.constant 0 : index
    %68 = vector.load %arg5[%c176, %c0_76] : memref<256x384xf32, #tpu.memory_space<vmem>>, vector<8x384xf32>
    tpu.vector_store %arg5[%c176, %c0_76], %67 {strides = array<i32>} : memref<256x384xf32, #tpu.memory_space<vmem>>, vector<8x384xf32>,
    %c0_77 = arith.constant 0 : index
    %c0_78 = arith.constant 0 : index
    %c138 = arith.constant 138 : index
    %69 = vector.load %arg2[%c0_77, %c0_78, %c138] : memref<1x8x640xf32, #tpu.memory_space<vmem>>, vector<1x8x384xf32>
    %70 = vector.shape_cast %69 : vector<1x8x384xf32> to vector<8x384xf32>
    %c184 = arith.constant 184 : index
    %c0_79 = arith.constant 0 : index
    %71 = vector.load %arg5[%c184, %c0_79] : memref<256x384xf32, #tpu.memory_space<vmem>>, vector<8x384xf32>
    tpu.vector_store %arg5[%c184, %c0_79], %70 {strides = array<i32>} : memref<256x384xf32, #tpu.memory_space<vmem>>, vector<8x384xf32>,
    %c0_80 = arith.constant 0 : index
    %c0_81 = arith.constant 0 : index
    %c144_82 = arith.constant 144 : index
    %72 = vector.load %arg2[%c0_80, %c0_81, %c144_82] : memref<1x8x640xf32, #tpu.memory_space<vmem>>, vector<1x8x384xf32>
    %73 = vector.shape_cast %72 : vector<1x8x384xf32> to vector<8x384xf32>
    %c192 = arith.constant 192 : index
    %c0_83 = arith.constant 0 : index
    %74 = vector.load %arg5[%c192, %c0_83] : memref<256x384xf32, #tpu.memory_space<vmem>>, vector<8x384xf32>
    tpu.vector_store %arg5[%c192, %c0_83], %73 {strides = array<i32>} : memref<256x384xf32, #tpu.memory_space<vmem>>, vector<8x384xf32>,
    %c0_84 = arith.constant 0 : index
    %c0_85 = arith.constant 0 : index
    %c145 = arith.constant 145 : index
    %75 = vector.load %arg2[%c0_84, %c0_85, %c145] : memref<1x8x640xf32, #tpu.memory_space<vmem>>, vector<1x8x384xf32>
    %76 = vector.shape_cast %75 : vector<1x8x384xf32> to vector<8x384xf32>
    %c200 = arith.constant 200 : index
    %c0_86 = arith.constant 0 : index
    %77 = vector.load %arg5[%c200, %c0_86] : memref<256x384xf32, #tpu.memory_space<vmem>>, vector<8x384xf32>
    tpu.vector_store %arg5[%c200, %c0_86], %76 {strides = array<i32>} : memref<256x384xf32, #tpu.memory_space<vmem>>, vector<8x384xf32>,
    %c0_87 = arith.constant 0 : index
    %c0_88 = arith.constant 0 : index
    %c146 = arith.constant 146 : index
    %78 = vector.load %arg2[%c0_87, %c0_88, %c146] : memref<1x8x640xf32, #tpu.memory_space<vmem>>, vector<1x8x384xf32>
    %79 = vector.shape_cast %78 : vector<1x8x384xf32> to vector<8x384xf32>
    %c208 = arith.constant 208 : index
    %c0_89 = arith.constant 0 : index
    %80 = vector.load %arg5[%c208, %c0_89] : memref<256x384xf32, #tpu.memory_space<vmem>>, vector<8x384xf32>
    tpu.vector_store %arg5[%c208, %c0_89], %79 {strides = array<i32>} : memref<256x384xf32, #tpu.memory_space<vmem>>, vector<8x384xf32>,
    %cst = arith.constant 0.000000e+00 : f32
    %81 = vector.broadcast %cst : f32 to vector<40x384xf32>
    %c216 = arith.constant 216 : index
    %c0_90 = arith.constant 0 : index
    %82 = vector.load %arg5[%c216, %c0_90] : memref<256x384xf32, #tpu.memory_space<vmem>>, vector<40x384xf32>
    tpu.vector_store %arg5[%c216, %c0_90], %81 {strides = array<i32>} : memref<256x384xf32, #tpu.memory_space<vmem>>, vector<40x384xf32>,
    %c0_91 = arith.constant 0 : index
    %c0_92 = arith.constant 0 : index
    %83 = vector.load %arg1[%c0_91, %c0_92] : memref<16x256xf32, #tpu.memory_space<vmem>>, vector<16x256xf32>
    %c0_93 = arith.constant 0 : index
    %c0_94 = arith.constant 0 : index
    %84 = vector.load %arg5[%c0_93, %c0_94] : memref<256x384xf32, #tpu.memory_space<vmem>>, vector<256x384xf32>
    %cst_95 = arith.constant dense<0.000000e+00> : vector<16x384xf32>
    %85 = tpu.matmul %83, %84, %cst_95 {dimension_numbers = #tpu.dot_dimension_numbers<[1], [0], [0], [1], [0, 0, 1, 1], [], []>} : vector<16x256xf32>, vector<256x384xf32>, vector<16x384xf32> -> vector<16x384xf32>
    %c0_96 = arith.constant 0 : index
    %c0_97 = arith.constant 0 : index
    %86 = vector.load %arg3[%c0_96, %c0_97] : memref<16x2xf32, #tpu.memory_space<vmem>>, vector<16x1xf32>
    %87 = vector.broadcast %86 : vector<16x1xf32> to vector<16x384xf32>
    %88 = arith.addf %85, %87 : vector<16x384xf32>
    %cst_98 = arith.constant 0.000000e+00 : f32
    %89 = vector.broadcast %cst_98 : f32 to vector<16x384xf32>
    %90 = arith.maximumf %88, %89 : vector<16x384xf32>
    %cst_99 = arith.constant 5.000000e-01 : f32
    %91 = vector.broadcast %cst_99 : f32 to vector<16x384xf32>
    %92 = arith.mulf %91, %90 : vector<16x384xf32>
    %cst_100 = arith.constant 0.707106769 : f32
    %93 = vector.broadcast %cst_100 : f32 to vector<16x384xf32>
    %94 = arith.mulf %90, %93 : vector<16x384xf32>
    %95 = math.erf %94 : vector<16x384xf32>
    %cst_101 = arith.constant 1.000000e+00 : f32
    %96 = vector.broadcast %cst_101 : f32 to vector<16x384xf32>
    %97 = arith.addf %96, %95 : vector<16x384xf32>
    %98 = arith.mulf %92, %97 : vector<16x384xf32>
    %cst_102 = arith.constant 5.000000e-01 : f32
    %99 = vector.broadcast %cst_102 : f32 to vector<16x384xf32>
    %100 = arith.mulf %99, %98 : vector<16x384xf32>
    %101 = math.tanh %100 : vector<16x384xf32>
    %cst_103 = arith.constant 1.000000e+00 : f32
    %102 = vector.broadcast %cst_103 : f32 to vector<16x384xf32>
    %103 = arith.addf %102, %101 : vector<16x384xf32>
    %cst_104 = arith.constant 5.000000e-01 : f32
    %104 = vector.broadcast %cst_104 : f32 to vector<16x384xf32>
    %105 = arith.mulf %104, %103 : vector<16x384xf32>
    %c0_105 = arith.constant 0 : index
    %c1_106 = arith.constant 1 : index
    %106 = vector.load %arg3[%c0_105, %c1_106] : memref<16x2xf32, #tpu.memory_space<vmem>>, vector<16x1xf32>
    %107 = vector.broadcast %106 : vector<16x1xf32> to vector<16x384xf32>
    %108 = arith.addf %105, %107 : vector<16x384xf32>
    %c0_107 = arith.constant 0 : index
    %c0_108 = arith.constant 0 : index
    %c0_109 = arith.constant 0 : index
    %109 = vector.load %arg4[%c0_107, %c0_108, %c0_109] : memref<1x16x384xf32, #tpu.memory_space<vmem>>, vector<1x16x384xf32>
    %110 = vector.shape_cast %109 : vector<1x16x384xf32> to vector<16x384xf32>
    %111 = vector.shape_cast %108 : vector<16x384xf32> to vector<1x16x384xf32>
    tpu.vector_store %arg4[%c0_107, %c0_108, %c0_109], %111 {strides = array<i32>} : memref<1x16x384xf32, #tpu.memory_space<vmem>>, vector<1x16x384xf32>,
    return
  }
  func.func @transform_0(%arg0: i32) -> (i32, i32) {
    %c0_i32 = arith.constant 0 : i32
    %c0_i32_0 = arith.constant 0 : i32
    %c0_i32_1 = arith.constant 0 : i32
    return %c0_i32, %c0_i32_0 : i32, i32
  }
  func.func @transform_1(%arg0: i32) -> (i32, i32, i32) {
    %c0_i32 = arith.constant 0 : i32
    %c0_i32_0 = arith.constant 0 : i32
    %c0_i32_1 = arith.constant 0 : i32
    return %arg0, %c0_i32, %c0_i32_0 : i32, i32, i32
  }
  func.func @transform_2(%arg0: i32) -> (i32, i32) {
    %c0_i32 = arith.constant 0 : i32
    %c0_i32_0 = arith.constant 0 : i32
    %c0_i32_1 = arith.constant 0 : i32
    return %c0_i32, %c0_i32_0 : i32, i32
  }
  func.func @transform_3(%arg0: i32) -> (i32, i32, i32) {
    %c0_i32 = arith.constant 0 : i32
    %c0_i32_0 = arith.constant 0 : i32
    %c0_i32_1 = arith.constant 0 : i32
    return %arg0, %c0_i32, %c0_i32_0 : i32, i32, i32
  }
}

</mosaic_0001>

<llo_original>
// kernel: conv3d_act_bias.1
$region0: #{conv3d_act_bias.1}
  #allocation0 [shape = 'u32[]', space=smem, size = 0x4, offset = 0x4, fixed_abs, tag = 'smem constant byte address 0x4 - core index']
  #allocation1 [shape = 'u32[144,128]{1,0:T(1,128)}', space=vmem, size = 0x12000, scoped, tag = 'internal scratch']
  #allocation2 [shape = 'f32[256,384]{1,0:T(8,128)}', space=vmem, size = 0x60000, scoped, tag = 'scratch operand']
  %s0 = inlined_call_operand.vmem [shape: f32[16,256], index: 0, kind: input, shape index: {}]
  %s1 = inlined_call_operand.vmem [shape: f32[2,8,640], index: 1, kind: input, shape index: {}]
  %s2 = inlined_call_operand.vmem [shape: f32[16,2], index: 2, kind: input, shape index: {}]
  %s3 = inlined_call_operand.vmem [shape: f32[2,16,384], index: 3, kind: output, shape index: {}]
  %s4 = sld [smem:[#allocation0]]
  $region45: #{conv3d_act_bias.1} parent=0
    _
  %s6 = ssub.s32 1, %s4
  %s7 = scalar_select 0, %s6, %s4
  loop: start=0, step=1, limit=4
  $region2: #{conv3d_act_bias.1} parent=0 // loop_pre_header
    _
  $region3: #{conv3d_act_bias.1} parent=0 // loop_header
    %s9 = sphi 0, %s13
    %p10 = scmp.ge.s32.totalorder %s9, 4
    %s17 = sphi 0, %s17
    %s19 = sphi 0, %s17
    %s20 = sphi 0, %s19
    %s34 = sphi 0, %s20
    %s40 = sphi 0, %s42
    %s43 = sphi 0, %s40
    %s44 = sphi 0, %s43
    %s60 = sphi 0, %s44
    %s64 = sphi 0, %s64
    %s66 = sphi 0, %s64
    %s67 = sphi 0, %s66
    %s81 = sphi 0, %s67
    %s87 = sphi 0, %s89
    %s90 = sphi 0, %s87
    %s91 = sphi 0, %s90
    %s107 = sphi 0, %s91
  $region4: #{conv3d_act_bias.1} parent=0 // loop_header_branch
    %12 = sbr.rel (%p10) target = $region8
  $region5: #{conv3d_act_bias.1} parent=0 // loop_body
    %s14 = ssub.s32 %s9, 1
    %s15 = ssub.s32 %s9, 2
    %s16 = sadd.s32 %s9, 1
    %s18 = sadd.s32 %s17, 1
    %p21 = scmp.eq.s32.totalorder %s9, 1
    %p22 = scmp.ne.s32.totalorder %s17, %s19
    %p23 = scmp.eq.s32.totalorder %s9, 0
    %p24 = por %p22, %p23
    %p25 = scmp.ne.s32.totalorder %s17, %s19
    %p26 = scmp.eq.s32.totalorder %s14, 1
    %p27 = por %p25, %p26
    %p28 = scmp.ne.s32.totalorder %s19, %s20
    %p29 = scmp.eq.s32.totalorder %s14, 0
    %p30 = por %p28, %p29
    %p31 = scmp.ne.s32.totalorder %s19, %s20
    %p32 = scmp.eq.s32.totalorder %s15, 1
    %p33 = por %p31, %p32
    %p35 = scmp.ne.s32.totalorder %s20, %s34
    %p36 = scmp.eq.s32.totalorder %s15, 0
    %p37 = por %p35, %p36
    %s38 = ssub.s32 %s9, %s16
    %p39 = scmp.eq.s32.totalorder %s38, 0
    %s41 = sadd.s32 %s40, 1
    %s42 = scalar_select %p39, %s40, %s41
    %p45 = pneg %p39
    %p46 = scmp.eq.s32.totalorder %s9, 1
    %p47 = por %p45, %p46
    %p48 = scmp.ne.s32.totalorder %s40, %s43
    %p49 = scmp.eq.s32.totalorder %s9, 0
    %p50 = por %p48, %p49
    %p51 = scmp.ne.s32.totalorder %s40, %s43
    %p52 = scmp.eq.s32.totalorder %s14, 1
    %p53 = por %p51, %p52
    %p54 = scmp.ne.s32.totalorder %s43, %s44
    %p55 = scmp.eq.s32.totalorder %s14, 0
    %p56 = por %p54, %p55
    %p57 = scmp.ne.s32.totalorder %s43, %s44
    %p58 = scmp.eq.s32.totalorder %s15, 1
    %p59 = por %p57, %p58
    %p61 = scmp.ne.s32.totalorder %s44, %s60
    %p62 = scmp.eq.s32.totalorder %s15, 0
    %p63 = por %p61, %p62
    %s65 = sadd.s32 %s64, 1
    %p68 = scmp.eq.s32.totalorder %s9, 1
    %p69 = scmp.ne.s32.totalorder %s64, %s66
    %p70 = scmp.eq.s32.totalorder %s9, 0
    %p71 = por %p69, %p70
    %p72 = scmp.ne.s32.totalorder %s64, %s66
    %p73 = scmp.eq.s32.totalorder %s14, 1
    %p74 = por %p72, %p73
    %p75 = scmp.ne.s32.totalorder %s66, %s67
    %p76 = scmp.eq.s32.totalorder %s14, 0
    %p77 = por %p75, %p76
    %p78 = scmp.ne.s32.totalorder %s66, %s67
    %p79 = scmp.eq.s32.totalorder %s15, 1
    %p80 = por %p78, %p79
    %p82 = scmp.ne.s32.totalorder %s67, %s81
    %p83 = scmp.eq.s32.totalorder %s15, 0
    %p84 = por %p82, %p83
    %s85 = ssub.s32 %s9, %s16
    %p86 = scmp.eq.s32.totalorder %s85, 0
    %s88 = sadd.s32 %s87, 1
    %s89 = scalar_select %p86, %s87, %s88
    %p92 = pneg %p86
    %p93 = scmp.eq.s32.totalorder %s9, 1
    %p94 = por %p92, %p93
    %p95 = scmp.ne.s32.totalorder %s87, %s90
    %p96 = scmp.eq.s32.totalorder %s9, 0
    %p97 = por %p95, %p96
    %p98 = scmp.ne.s32.totalorder %s87, %s90
    %p99 = scmp.eq.s32.totalorder %s14, 1
    %p100 = por %p98, %p99
    %p101 = scmp.ne.s32.totalorder %s90, %s91
    %p102 = scmp.eq.s32.totalorder %s14, 0
    %p103 = por %p101, %p102
    %p104 = scmp.ne.s32.totalorder %s90, %s91
    %p105 = scmp.eq.s32.totalorder %s15, 1
    %p106 = por %p104, %p105
    %p108 = scmp.ne.s32.totalorder %s91, %s107
    %p109 = scmp.eq.s32.totalorder %s15, 0
    %p110 = por %p108, %p109
    %p111 = scmp.le.s32.totalorder 1, %s9
    %p112 = scmp.lt.s32.totalorder %s9, 3
    %p113 = pnand %p111, %p112
    %p114 = pneg %p113
    // Predicated region
    $region9: #{conv3d_act_bias.1} parent=5 // pred_check
      _
    $region10: #{conv3d_act_bias.1} parent=5 // pred_check_branch
      %116 = sbr.rel (%p113) target = $region12
    $region11: #{conv3d_act_bias.1} parent=5 // pred_region
      %s117 = ssub.s32 %s9, 1
      // Predicated region
      $region13: #{conv3d_act_bias.1} parent=11 // pred_check
        %p118 = pneg %p30
      $region14: #{conv3d_act_bias.1} parent=11 // pred_check_branch
        %120 = sbr.rel (%p118) target = $region16
      $region15: #{conv3d_act_bias.1} parent=11 // pred_region
        _
      $region16: #{conv3d_act_bias.1} parent=11 // pred_fallthru
        _
      // Predicated region
      $region17: #{conv3d_act_bias.1} parent=11 // pred_check
        %p121 = pneg %p77
      $region18: #{conv3d_act_bias.1} parent=11 // pred_check_branch
        %123 = sbr.rel (%p121) target = $region20
      $region19: #{conv3d_act_bias.1} parent=11 // pred_region
        _
      $region20: #{conv3d_act_bias.1} parent=11 // pred_fallthru
        _
    $region12: #{conv3d_act_bias.1} parent=5 // pred_fallthru
      _
    %p124 = scmp.lt.s32.totalorder %s9, 2
    // Predicated region
    $region21: #{conv3d_act_bias.1} parent=5 // pred_check
      %p125 = pneg %p124
    $region22: #{conv3d_act_bias.1} parent=5 // pred_check_branch
      %127 = sbr.rel (%p125) target = $region24
    $region23: #{conv3d_act_bias.1} parent=5 // pred_region
      // Predicated region
      $region25: #{conv3d_act_bias.1} parent=23 // pred_check
        %p128 = pneg %p50
      $region26: #{conv3d_act_bias.1} parent=23 // pred_check_branch
        %130 = sbr.rel (%p128) target = $region28
      $region27: #{conv3d_act_bias.1} parent=23 // pred_region
        %p131 = scmp.lt.s32.totalorder %s9, 1
        %s132 = scalar_select %p131, %s9, 1
        %s133 = smul.addr %s132, 5
        %s134 = smul.addr %s133, 8
        %s135 = scalar_lea.vmem %s1, %s134
      $region28: #{conv3d_act_bias.1} parent=23 // pred_fallthru
        _
    $region24: #{conv3d_act_bias.1} parent=5 // pred_fallthru
      _
    %p136 = scmp.le.s32.totalorder 1, %s9
    %p137 = scmp.lt.s32.totalorder %s9, 3
    %p138 = pnand %p136, %p137
    %p139 = pneg %p138
    // Predicated region
    $region29: #{conv3d_act_bias.1} parent=5 // pred_check
      _
    $region30: #{conv3d_act_bias.1} parent=5 // pred_check_branch
      %141 = sbr.rel (%p138) target = $region32
    $region31: #{conv3d_act_bias.1} parent=5 // pred_region
      %s142 = ssub.s32 %s9, 1
      %p143 = pneg %p30
      %p144 = pneg %p27
      %p145 = scmp.lt.s32.totalorder %s14, 1
      %s146 = scalar_select %p145, %s14, 1
      %s147 = smul.addr %s146, 5
      %s148 = smul.addr %s147, 8
      %s149 = scalar_lea.vmem %s1, %s148
      %p150 = pneg %p56
      %p151 = pneg %p53
      %p152 = pneg %p77
      %p153 = pneg %p74
      %p154 = pneg %p103
      %p155 = pneg %p100
      %p156 = scmp.lt.s32.totalorder %s14, 1
      %s157 = scalar_select %p156, %s14, 1
      %s158 = smul.addr %s157, 6
      %s159 = smul.addr %s158, 8
      %s160 = scalar_lea.vmem %s3, %s159
      %p161 = scmp.lt.s32.totalorder %s14, 1
      %s162 = scalar_select %p161, %s14, 1
      %s163 = smul.addr %s162, 5
      %s164 = smul.addr %s163, 8
      %s165 = scalar_lea.vmem %s1, %s164
      %p166 = scmp.lt.s32.totalorder %s14, 1
      %s167 = scalar_select %p166, %s14, 1
      %s168 = smul.addr %s167, 6
      %s169 = smul.addr %s168, 8
      %s170 = scalar_lea.vmem %s3, %s169
      %v171 = vld [vmem:[%s165] sm:$0xff]
      %v172 = vld [vmem:[%s165 + $0x8] sm:$0xff]
      %v173 = vld [vmem:[%s165 + $0x10] sm:$0xff]
      %174 = vst [vmem:[#allocation2] sm:$0xff] %v171
      %175 = vst [vmem:[#allocation2 + $0x8] sm:$0xff] %v172
      %176 = vst [vmem:[#allocation2 + $0x10] sm:$0xff] %v173
      %v177 = vld [vmem:[%s165] sm:$0xff]
      %v178 = vld [vmem:[%s165 + $0x8] sm:$0xff]
      %v179 = vld [vmem:[%s165 + $0x10] sm:$0xff]
      %v180 = vld [vmem:[%s165 + $0x18] sm:$0xff]
      %185 = vrot.lane.b32.xlu0 %v177, 127
      %v186 = vpop.permute.xlu0 %185
      %187 = vrot.lane.b32.xlu0 %v178, 127
      %v188 = vpop.permute.xlu0 %187
      %189 = vrot.lane.b32.xlu0 %v179, 127
      %v190 = vpop.permute.xlu0 %189
      %191 = vrot.lane.b32.xlu0 %v180, 127
      %v192 = vpop.permute.xlu0 %191
      %vm193 = vcmask 1039360
      %v194 = vsel %vm193, %v186, %v188
      %v195 = vsel %vm193, %v188, %v190
      %v196 = vsel %vm193, %v190, %v192
      %200 = vst [vmem:[#allocation2 + $0x18] sm:$0xff] %v194
      %201 = vst [vmem:[#allocation2 + $0x20] sm:$0xff] %v195
      %202 = vst [vmem:[#allocation2 + $0x28] sm:$0xff] %v196
      %v203 = vld [vmem:[%s165] sm:$0xff]
      %v204 = vld [vmem:[%s165 + $0x8] sm:$0xff]
      %v205 = vld [vmem:[%s165 + $0x10] sm:$0xff]
      %v206 = vld [vmem:[%s165 + $0x18] sm:$0xff]
      %211 = vrot.lane.b32.xlu0 %v203, 126
      %v212 = vpop.permute.xlu0 %211
      %213 = vrot.lane.b32.xlu0 %v204, 126
      %v214 = vpop.permute.xlu0 %213
      %215 = vrot.lane.b32.xlu0 %v205, 126
      %v216 = vpop.permute.xlu0 %215
      %217 = vrot.lane.b32.xlu0 %v206, 126
      %v218 = vpop.permute.xlu0 %217
      %vm219 = vcmask 1031168
      %v220 = vsel %vm219, %v212, %v214
      %v221 = vsel %vm219, %v214, %v216
      %v222 = vsel %vm219, %v216, %v218
      %226 = vst [vmem:[#allocation2 + $0x30] sm:$0xff] %v220
      %227 = vst [vmem:[#allocation2 + $0x38] sm:$0xff] %v221
      %228 = vst [vmem:[#allocation2 + $0x40] sm:$0xff] %v222
      %v229 = vld [vmem:[%s165] sm:$0xff]
      %v230 = vld [vmem:[%s165 + $0x8] sm:$0xff]
      %v231 = vld [vmem:[%s165 + $0x10] sm:$0xff]
      %v232 = vld [vmem:[%s165 + $0x18] sm:$0xff]
      %237 = vrot.lane.b32.xlu0 %v229, 120
      %v238 = vpop.permute.xlu0 %237
      %239 = vrot.lane.b32.xlu0 %v230, 120
      %v240 = vpop.permute.xlu0 %239
      %241 = vrot.lane.b32.xlu0 %v231, 120
      %v242 = vpop.permute.xlu0 %241
      %243 = vrot.lane.b32.xlu0 %v232, 120
      %v244 = vpop.permute.xlu0 %243
      %vm245 = vcmask 982016
      %v246 = vsel %vm245, %v238, %v240
      %v247 = vsel %vm245, %v240, %v242
      %v248 = vsel %vm245, %v242, %v244
      %252 = vst [vmem:[#allocation2 + $0x48] sm:$0xff] %v246
      %253 = vst [vmem:[#allocation2 + $0x50] sm:$0xff] %v247
      %254 = vst [vmem:[#allocation2 + $0x58] sm:$0xff] %v248
      %v255 = vld [vmem:[%s165] sm:$0xff]
      %v256 = vld [vmem:[%s165 + $0x8] sm:$0xff]
      %v257 = vld [vmem:[%s165 + $0x10] sm:$0xff]
      %v258 = vld [vmem:[%s165 + $0x18] sm:$0xff]
      %263 = vrot.lane.b32.xlu0 %v255, 119
      %v264 = vpop.permute.xlu0 %263
      %265 = vrot.lane.b32.xlu0 %v256, 119
      %v266 = vpop.permute.xlu0 %265
      %267 = vrot.lane.b32.xlu0 %v257, 119
      %v268 = vpop.permute.xlu0 %267
      %269 = vrot.lane.b32.xlu0 %v258, 119
      %v270 = vpop.permute.xlu0 %269
      %vm271 = vcmask 973824
      %v272 = vsel %vm271, %v264, %v266
      %v273 = vsel %vm271, %v266, %v268
      %v274 = vsel %vm271, %v268, %v270
      %278 = vst [vmem:[#allocation2 + $0x60] sm:$0xff] %v272
      %279 = vst [vmem:[#allocation2 + $0x68] sm:$0xff] %v273
      %280 = vst [vmem:[#allocation2 + $0x70] sm:$0xff] %v274
      %v281 = vld [vmem:[%s165] sm:$0xff]
      %v282 = vld [vmem:[%s165 + $0x8] sm:$0xff]
      %v283 = vld [vmem:[%s165 + $0x10] sm:$0xff]
      %v284 = vld [vmem:[%s165 + $0x18] sm:$0xff]
      %289 = vrot.lane.b32.xlu0 %v281, 118
      %v290 = vpop.permute.xlu0 %289
      %291 = vrot.lane.b32.xlu0 %v282, 118
      %v292 = vpop.permute.xlu0 %291
      %293 = vrot.lane.b32.xlu0 %v283, 118
      %v294 = vpop.permute.xlu0 %293
      %295 = vrot.lane.b32.xlu0 %v284, 118
      %v296 = vpop.permute.xlu0 %295
      %vm297 = vcmask 965632
      %v298 = vsel %vm297, %v290, %v292
      %v299 = vsel %vm297, %v292, %v294
      %v300 = vsel %vm297, %v294, %v296
      %304 = vst [vmem:[#allocation2 + $0x78] sm:$0xff] %v298
      %305 = vst [vmem:[#allocation2 + $0x80] sm:$0xff] %v299
      %306 = vst [vmem:[#allocation2 + $0x88] sm:$0xff] %v300
      %v307 = vld [vmem:[%s165] sm:$0xff]
      %v308 = vld [vmem:[%s165 + $0x8] sm:$0xff]
      %v309 = vld [vmem:[%s165 + $0x10] sm:$0xff]
      %v310 = vld [vmem:[%s165 + $0x18] sm:$0xff]
      %315 = vrot.lane.b32.xlu0 %v307, 112
      %v316 = vpop.permute.xlu0 %315
      %317 = vrot.lane.b32.xlu0 %v308, 112
      %v318 = vpop.permute.xlu0 %317
      %319 = vrot.lane.b32.xlu0 %v309, 112
      %v320 = vpop.permute.xlu0 %319
      %321 = vrot.lane.b32.xlu0 %v310, 112
      %v322 = vpop.permute.xlu0 %321
      %vm323 = vcmask 916480
      %v324 = vsel %vm323, %v316, %v318
      %v325 = vsel %vm323, %v318, %v320
      %v326 = vsel %vm323, %v320, %v322
      %330 = vst [vmem:[#allocation2 + $0x90] sm:$0xff] %v324
      %331 = vst [vmem:[#allocation2 + $0x98] sm:$0xff] %v325
      %332 = vst [vmem:[#allocation2 + $0xa0] sm:$0xff] %v326
      %v333 = vld [vmem:[%s165] sm:$0xff]
      %v334 = vld [vmem:[%s165 + $0x8] sm:$0xff]
      %v335 = vld [vmem:[%s165 + $0x10] sm:$0xff]
      %v336 = vld [vmem:[%s165 + $0x18] sm:$0xff]
      %341 = vrot.lane.b32.xlu0 %v333, 111
      %v342 = vpop.permute.xlu0 %341
      %343 = vrot.lane.b32.xlu0 %v334, 111
      %v344 = vpop.permute.xlu0 %343
      %345 = vrot.lane.b32.xlu0 %v335, 111
      %v346 = vpop.permute.xlu0 %345
      %347 = vrot.lane.b32.xlu0 %v336, 111
      %v348 = vpop.permute.xlu0 %347
      %vm349 = vcmask 908288
      %v350 = vsel %vm349, %v342, %v344
      %v351 = vsel %vm349, %v344, %v346
      %v352 = vsel %vm349, %v346, %v348
      %356 = vst [vmem:[#allocation2 + $0xa8] sm:$0xff] %v350
      %357 = vst [vmem:[#allocation2 + $0xb0] sm:$0xff] %v351
      %358 = vst [vmem:[#allocation2 + $0xb8] sm:$0xff] %v352
      %v359 = vld [vmem:[%s165] sm:$0xff]
      %v360 = vld [vmem:[%s165 + $0x8] sm:$0xff]
      %v361 = vld [vmem:[%s165 + $0x10] sm:$0xff]
      %v362 = vld [vmem:[%s165 + $0x18] sm:$0xff]
      %367 = vrot.lane.b32.xlu0 %v359, 110
      %v368 = vpop.permute.xlu0 %367
      %369 = vrot.lane.b32.xlu0 %v360, 110
      %v370 = vpop.permute.xlu0 %369
      %371 = vrot.lane.b32.xlu0 %v361, 110
      %v372 = vpop.permute.xlu0 %371
      %373 = vrot.lane.b32.xlu0 %v362, 110
      %v374 = vpop.permute.xlu0 %373
      %vm375 = vcmask 900096
      %v376 = vsel %vm375, %v368, %v370
      %v377 = vsel %vm375, %v370, %v372
      %v378 = vsel %vm375, %v372, %v374
      %382 = vst [vmem:[#allocation2 + $0xc0] sm:$0xff] %v376
      %383 = vst [vmem:[#allocation2 + $0xc8] sm:$0xff] %v377
      %384 = vst [vmem:[#allocation2 + $0xd0] sm:$0xff] %v378
      %v385 = vld [vmem:[%s165] sm:$0xff]
      %v386 = vld [vmem:[%s165 + $0x8] sm:$0xff]
      %v387 = vld [vmem:[%s165 + $0x10] sm:$0xff]
      %v388 = vld [vmem:[%s165 + $0x18] sm:$0xff]
      %393 = vrot.lane.b32.xlu0 %v385, 64
      %v394 = vpop.permute.xlu0 %393
      %395 = vrot.lane.b32.xlu0 %v386, 64
      %v396 = vpop.permute.xlu0 %395
      %397 = vrot.lane.b32.xlu0 %v387, 64
      %v398 = vpop.permute.xlu0 %397
      %399 = vrot.lane.b32.xlu0 %v388, 64
      %v400 = vpop.permute.xlu0 %399
      %vm401 = vcmask 523264
      %v402 = vsel %vm401, %v394, %v396
      %v403 = vsel %vm401, %v396, %v398
      %v404 = vsel %vm401, %v398, %v400
      %408 = vst [vmem:[#allocation2 + $0xd8] sm:$0xff] %v402
      %409 = vst [vmem:[#allocation2 + $0xe0] sm:$0xff] %v403
      %410 = vst [vmem:[#allocation2 + $0xe8] sm:$0xff] %v404
      %v411 = vld [vmem:[%s165] sm:$0xff]
      %v412 = vld [vmem:[%s165 + $0x8] sm:$0xff]
      %v413 = vld [vmem:[%s165 + $0x10] sm:$0xff]
      %v414 = vld [vmem:[%s165 + $0x18] sm:$0xff]
      %419 = vrot.lane.b32.xlu0 %v411, 63
      %v420 = vpop.permute.xlu0 %419
      %421 = vrot.lane.b32.xlu0 %v412, 63
      %v422 = vpop.permute.xlu0 %421
      %423 = vrot.lane.b32.xlu0 %v413, 63
      %v424 = vpop.permute.xlu0 %423
      %425 = vrot.lane.b32.xlu0 %v414, 63
      %v426 = vpop.permute.xlu0 %425
      %vm427 = vcmask 515072
      %v428 = vsel %vm427, %v420, %v422
      %v429 = vsel %vm427, %v422, %v424
      %v430 = vsel %vm427, %v424, %v426
      %434 = vst [vmem:[#allocation2 + $0xf0] sm:$0xff] %v428
      %435 = vst [vmem:[#allocation2 + $0xf8] sm:$0xff] %v429
      %436 = vst [vmem:[#allocation2 + $0x100] sm:$0xff] %v430
      %v437 = vld [vmem:[%s165] sm:$0xff]
      %v438 = vld [vmem:[%s165 + $0x8] sm:$0xff]
      %v439 = vld [vmem:[%s165 + $0x10] sm:$0xff]
      %v440 = vld [vmem:[%s165 + $0x18] sm:$0xff]
      %445 = vrot.lane.b32.xlu0 %v437, 62
      %v446 = vpop.permute.xlu0 %445
      %447 = vrot.lane.b32.xlu0 %v438, 62
      %v448 = vpop.permute.xlu0 %447
      %449 = vrot.lane.b32.xlu0 %v439, 62
      %v450 = vpop.permute.xlu0 %449
      %451 = vrot.lane.b32.xlu0 %v440, 62
      %v452 = vpop.permute.xlu0 %451
      %vm453 = vcmask 506880
      %v454 = vsel %vm453, %v446, %v448
      %v455 = vsel %vm453, %v448, %v450
      %v456 = vsel %vm453, %v450, %v452
      %460 = vst [vmem:[#allocation2 + $0x108] sm:$0xff] %v454
      %461 = vst [vmem:[#allocation2 + $0x110] sm:$0xff] %v455
      %462 = vst [vmem:[#allocation2 + $0x118] sm:$0xff] %v456
      %v463 = vld [vmem:[%s165] sm:$0xff]
      %v464 = vld [vmem:[%s165 + $0x8] sm:$0xff]
      %v465 = vld [vmem:[%s165 + $0x10] sm:$0xff]
      %v466 = vld [vmem:[%s165 + $0x18] sm:$0xff]
      %471 = vrot.lane.b32.xlu0 %v463, 56
      %v472 = vpop.permute.xlu0 %471
      %473 = vrot.lane.b32.xlu0 %v464, 56
      %v474 = vpop.permute.xlu0 %473
      %475 = vrot.lane.b32.xlu0 %v465, 56
      %v476 = vpop.permute.xlu0 %475
      %477 = vrot.lane.b32.xlu0 %v466, 56
      %v478 = vpop.permute.xlu0 %477
      %vm479 = vcmask 457728
      %v480 = vsel %vm479, %v472, %v474
      %v481 = vsel %vm479, %v474, %v476
      %v482 = vsel %vm479, %v476, %v478
      %486 = vst [vmem:[#allocation2 + $0x120] sm:$0xff] %v480
      %487 = vst [vmem:[#allocation2 + $0x128] sm:$0xff] %v481
      %488 = vst [vmem:[#allocation2 + $0x130] sm:$0xff] %v482
      %v489 = vld [vmem:[%s165] sm:$0xff]
      %v490 = vld [vmem:[%s165 + $0x8] sm:$0xff]
      %v491 = vld [vmem:[%s165 + $0x10] sm:$0xff]
      %v492 = vld [vmem:[%s165 + $0x18] sm:$0xff]
      %497 = vrot.lane.b32.xlu0 %v489, 55
      %v498 = vpop.permute.xlu0 %497
      %499 = vrot.lane.b32.xlu0 %v490, 55
      %v500 = vpop.permute.xlu0 %499
      %501 = vrot.lane.b32.xlu0 %v491, 55
      %v502 = vpop.permute.xlu0 %501
      %503 = vrot.lane.b32.xlu0 %v492, 55
      %v504 = vpop.permute.xlu0 %503
      %vm505 = vcmask 449536
      %v506 = vsel %vm505, %v498, %v500
      %v507 = vsel %vm505, %v500, %v502
      %v508 = vsel %vm505, %v502, %v504
      %512 = vst [vmem:[#allocation2 + $0x138] sm:$0xff] %v506
      %513 = vst [vmem:[#allocation2 + $0x140] sm:$0xff] %v507
      %514 = vst [vmem:[#allocation2 + $0x148] sm:$0xff] %v508
      %v515 = vld [vmem:[%s165] sm:$0xff]
      %v516 = vld [vmem:[%s165 + $0x8] sm:$0xff]
      %v517 = vld [vmem:[%s165 + $0x10] sm:$0xff]
      %v518 = vld [vmem:[%s165 + $0x18] sm:$0xff]
      %523 = vrot.lane.b32.xlu0 %v515, 54
      %v524 = vpop.permute.xlu0 %523
      %525 = vrot.lane.b32.xlu0 %v516, 54
      %v526 = vpop.permute.xlu0 %525
      %527 = vrot.lane.b32.xlu0 %v517, 54
      %v528 = vpop.permute.xlu0 %527
      %529 = vrot.lane.b32.xlu0 %v518, 54
      %v530 = vpop.permute.xlu0 %529
      %vm531 = vcmask 441344
      %v532 = vsel %vm531, %v524, %v526
      %v533 = vsel %vm531, %v526, %v528
      %v534 = vsel %vm531, %v528, %v530
      %538 = vst [vmem:[#allocation2 + $0x150] sm:$0xff] %v532
      %539 = vst [vmem:[#allocation2 + $0x158] sm:$0xff] %v533
      %540 = vst [vmem:[#allocation2 + $0x160] sm:$0xff] %v534
      %v541 = vld [vmem:[%s165] sm:$0xff]
      %v542 = vld [vmem:[%s165 + $0x8] sm:$0xff]
      %v543 = vld [vmem:[%s165 + $0x10] sm:$0xff]
      %v544 = vld [vmem:[%s165 + $0x18] sm:$0xff]
      %549 = vrot.lane.b32.xlu0 %v541, 48
      %v550 = vpop.permute.xlu0 %549
      %551 = vrot.lane.b32.xlu0 %v542, 48
      %v552 = vpop.permute.xlu0 %551
      %553 = vrot.lane.b32.xlu0 %v543, 48
      %v554 = vpop.permute.xlu0 %553
      %555 = vrot.lane.b32.xlu0 %v544, 48
      %v556 = vpop.permute.xlu0 %555
      %vm557 = vcmask 392192
      %v558 = vsel %vm557, %v550, %v552
      %v559 = vsel %vm557, %v552, %v554
      %v560 = vsel %vm557, %v554, %v556
      %564 = vst [vmem:[#allocation2 + $0x168] sm:$0xff] %v558
      %565 = vst [vmem:[#allocation2 + $0x170] sm:$0xff] %v559
      %566 = vst [vmem:[#allocation2 + $0x178] sm:$0xff] %v560
      %v567 = vld [vmem:[%s165] sm:$0xff]
      %v568 = vld [vmem:[%s165 + $0x8] sm:$0xff]
      %v569 = vld [vmem:[%s165 + $0x10] sm:$0xff]
      %v570 = vld [vmem:[%s165 + $0x18] sm:$0xff]
      %575 = vrot.lane.b32.xlu0 %v567, 47
      %v576 = vpop.permute.xlu0 %575
      %577 = vrot.lane.b32.xlu0 %v568, 47
      %v578 = vpop.permute.xlu0 %577
      %579 = vrot.lane.b32.xlu0 %v569, 47
      %v580 = vpop.permute.xlu0 %579
      %581 = vrot.lane.b32.xlu0 %v570, 47
      %v582 = vpop.permute.xlu0 %581
      %vm583 = vcmask 384000
      %v584 = vsel %vm583, %v576, %v578
      %v585 = vsel %vm583, %v578, %v580
      %v586 = vsel %vm583, %v580, %v582
      %590 = vst [vmem:[#allocation2 + $0x180] sm:$0xff] %v584
      %591 = vst [vmem:[#allocation2 + $0x188] sm:$0xff] %v585
      %592 = vst [vmem:[#allocation2 + $0x190] sm:$0xff] %v586
      %v593 = vld [vmem:[%s165] sm:$0xff]
      %v594 = vld [vmem:[%s165 + $0x8] sm:$0xff]
      %v595 = vld [vmem:[%s165 + $0x10] sm:$0xff]
      %v596 = vld [vmem:[%s165 + $0x18] sm:$0xff]
      %601 = vrot.lane.b32.xlu0 %v593, 46
      %v602 = vpop.permute.xlu0 %601
      %603 = vrot.lane.b32.xlu0 %v594, 46
      %v604 = vpop.permute.xlu0 %603
      %605 = vrot.lane.b32.xlu0 %v595, 46
      %v606 = vpop.permute.xlu0 %605
      %607 = vrot.lane.b32.xlu0 %v596, 46
      %v608 = vpop.permute.xlu0 %607
      %vm609 = vcmask 375808
      %v610 = vsel %vm609, %v602, %v604
      %v611 = vsel %vm609, %v604, %v606
      %v612 = vsel %vm609, %v606, %v608
      %616 = vst [vmem:[#allocation2 + $0x198] sm:$0xff] %v610
      %617 = vst [vmem:[#allocation2 + $0x1a0] sm:$0xff] %v611
      %618 = vst [vmem:[#allocation2 + $0x1a8] sm:$0xff] %v612
      %v619 = vld [vmem:[%s165 + $0x8] sm:$0xff]
      %v620 = vld [vmem:[%s165 + $0x10] sm:$0xff]
      %v621 = vld [vmem:[%s165 + $0x18] sm:$0xff]
      %622 = vst [vmem:[#allocation2 + $0x1b0] sm:$0xff] %v619
      %623 = vst [vmem:[#allocation2 + $0x1b8] sm:$0xff] %v620
      %624 = vst [vmem:[#allocation2 + $0x1c0] sm:$0xff] %v621
      %v625 = vld [vmem:[%s165 + $0x8] sm:$0xff]
      %v626 = vld [vmem:[%s165 + $0x10] sm:$0xff]
      %v627 = vld [vmem:[%s165 + $0x18] sm:$0xff]
      %v628 = vld [vmem:[%s165 + $0x20] sm:$0xff]
      %633 = vrot.lane.b32.xlu0 %v625, 127
      %v634 = vpop.permute.xlu0 %633
      %635 = vrot.lane.b32.xlu0 %v626, 127
      %v636 = vpop.permute.xlu0 %635
      %637 = vrot.lane.b32.xlu0 %v627, 127
      %v638 = vpop.permute.xlu0 %637
      %639 = vrot.lane.b32.xlu0 %v628, 127
      %v640 = vpop.permute.xlu0 %639
      %v641 = vsel %vm193, %v634, %v636
      %v642 = vsel %vm193, %v636, %v638
      %v643 = vsel %vm193, %v638, %v640
      %647 = vst [vmem:[#allocation2 + $0x1c8] sm:$0xff] %v641
      %648 = vst [vmem:[#allocation2 + $0x1d0] sm:$0xff] %v642
      %649 = vst [vmem:[#allocation2 + $0x1d8] sm:$0xff] %v643
      %v650 = vld [vmem:[%s165 + $0x8] sm:$0xff]
      %v651 = vld [vmem:[%s165 + $0x10] sm:$0xff]
      %v652 = vld [vmem:[%s165 + $0x18] sm:$0xff]
      %v653 = vld [vmem:[%s165 + $0x20] sm:$0xff]
      %658 = vrot.lane.b32.xlu0 %v650, 126
      %v659 = vpop.permute.xlu0 %658
      %660 = vrot.lane.b32.xlu0 %v651, 126
      %v661 = vpop.permute.xlu0 %660
      %662 = vrot.lane.b32.xlu0 %v652, 126
      %v663 = vpop.permute.xlu0 %662
      %664 = vrot.lane.b32.xlu0 %v653, 126
      %v665 = vpop.permute.xlu0 %664
      %v666 = vsel %vm219, %v659, %v661
      %v667 = vsel %vm219, %v661, %v663
      %v668 = vsel %vm219, %v663, %v665
      %672 = vst [vmem:[#allocation2 + $0x1e0] sm:$0xff] %v666
      %673 = vst [vmem:[#allocation2 + $0x1e8] sm:$0xff] %v667
      %674 = vst [vmem:[#allocation2 + $0x1f0] sm:$0xff] %v668
      %v675 = vld [vmem:[%s165 + $0x8] sm:$0xff]
      %v676 = vld [vmem:[%s165 + $0x10] sm:$0xff]
      %v677 = vld [vmem:[%s165 + $0x18] sm:$0xff]
      %v678 = vld [vmem:[%s165 + $0x20] sm:$0xff]
      %683 = vrot.lane.b32.xlu0 %v675, 120
      %v684 = vpop.permute.xlu0 %683
      %685 = vrot.lane.b32.xlu0 %v676, 120
      %v686 = vpop.permute.xlu0 %685
      %687 = vrot.lane.b32.xlu0 %v677, 120
      %v688 = vpop.permute.xlu0 %687
      %689 = vrot.lane.b32.xlu0 %v678, 120
      %v690 = vpop.permute.xlu0 %689
      %v691 = vsel %vm245, %v684, %v686
      %v692 = vsel %vm245, %v686, %v688
      %v693 = vsel %vm245, %v688, %v690
      %697 = vst [vmem:[#allocation2 + $0x1f8] sm:$0xff] %v691
      %698 = vst [vmem:[#allocation2 + $0x200] sm:$0xff] %v692
      %699 = vst [vmem:[#allocation2 + $0x208] sm:$0xff] %v693
      %v700 = vld [vmem:[%s165 + $0x8] sm:$0xff]
      %v701 = vld [vmem:[%s165 + $0x10] sm:$0xff]
      %v702 = vld [vmem:[%s165 + $0x18] sm:$0xff]
      %v703 = vld [vmem:[%s165 + $0x20] sm:$0xff]
      %708 = vrot.lane.b32.xlu0 %v700, 119
      %v709 = vpop.permute.xlu0 %708
      %710 = vrot.lane.b32.xlu0 %v701, 119
      %v711 = vpop.permute.xlu0 %710
      %712 = vrot.lane.b32.xlu0 %v702, 119
      %v713 = vpop.permute.xlu0 %712
      %714 = vrot.lane.b32.xlu0 %v703, 119
      %v715 = vpop.permute.xlu0 %714
      %v716 = vsel %vm271, %v709, %v711
      %v717 = vsel %vm271, %v711, %v713
      %v718 = vsel %vm271, %v713, %v715
      %722 = vst [vmem:[#allocation2 + $0x210] sm:$0xff] %v716
      %723 = vst [vmem:[#allocation2 + $0x218] sm:$0xff] %v717
      %724 = vst [vmem:[#allocation2 + $0x220] sm:$0xff] %v718
      %v725 = vld [vmem:[%s165 + $0x8] sm:$0xff]
      %v726 = vld [vmem:[%s165 + $0x10] sm:$0xff]
      %v727 = vld [vmem:[%s165 + $0x18] sm:$0xff]
      %v728 = vld [vmem:[%s165 + $0x20] sm:$0xff]
      %733 = vrot.lane.b32.xlu0 %v725, 118
      %v734 = vpop.permute.xlu0 %733
      %735 = vrot.lane.b32.xlu0 %v726, 118
      %v736 = vpop.permute.xlu0 %735
      %737 = vrot.lane.b32.xlu0 %v727, 118
      %v738 = vpop.permute.xlu0 %737
      %739 = vrot.lane.b32.xlu0 %v728, 118
      %v740 = vpop.permute.xlu0 %739
      %v741 = vsel %vm297, %v734, %v736
      %v742 = vsel %vm297, %v736, %v738
      %v743 = vsel %vm297, %v738, %v740
      %747 = vst [vmem:[#allocation2 + $0x228] sm:$0xff] %v741
      %748 = vst [vmem:[#allocation2 + $0x230] sm:$0xff] %v742
      %749 = vst [vmem:[#allocation2 + $0x238] sm:$0xff] %v743
      %v750 = vld [vmem:[%s165 + $0x8] sm:$0xff]
      %v751 = vld [vmem:[%s165 + $0x10] sm:$0xff]
      %v752 = vld [vmem:[%s165 + $0x18] sm:$0xff]
      %v753 = vld [vmem:[%s165 + $0x20] sm:$0xff]
      %758 = vrot.lane.b32.xlu0 %v750, 112
      %v759 = vpop.permute.xlu0 %758
      %760 = vrot.lane.b32.xlu0 %v751, 112
      %v761 = vpop.permute.xlu0 %760
      %762 = vrot.lane.b32.xlu0 %v752, 112
      %v763 = vpop.permute.xlu0 %762
      %764 = vrot.lane.b32.xlu0 %v753, 112
      %v765 = vpop.permute.xlu0 %764
      %v766 = vsel %vm323, %v759, %v761
      %v767 = vsel %vm323, %v761, %v763
      %v768 = vsel %vm323, %v763, %v765
      %772 = vst [vmem:[#allocation2 + $0x240] sm:$0xff] %v766
      %773 = vst [vmem:[#allocation2 + $0x248] sm:$0xff] %v767
      %774 = vst [vmem:[#allocation2 + $0x250] sm:$0xff] %v768
      %v775 = vld [vmem:[%s165 + $0x8] sm:$0xff]
      %v776 = vld [vmem:[%s165 + $0x10] sm:$0xff]
      %v777 = vld [vmem:[%s165 + $0x18] sm:$0xff]
      %v778 = vld [vmem:[%s165 + $0x20] sm:$0xff]
      %783 = vrot.lane.b32.xlu0 %v775, 111
      %v784 = vpop.permute.xlu0 %783
      %785 = vrot.lane.b32.xlu0 %v776, 111
      %v786 = vpop.permute.xlu0 %785
      %787 = vrot.lane.b32.xlu0 %v777, 111
      %v788 = vpop.permute.xlu0 %787
      %789 = vrot.lane.b32.xlu0 %v778, 111
      %v790 = vpop.permute.xlu0 %789
      %v791 = vsel %vm349, %v784, %v786
      %v792 = vsel %vm349, %v786, %v788
      %v793 = vsel %vm349, %v788, %v790
      %797 = vst [vmem:[#allocation2 + $0x258] sm:$0xff] %v791
      %798 = vst [vmem:[#allocation2 + $0x260] sm:$0xff] %v792
      %799 = vst [vmem:[#allocation2 + $0x268] sm:$0xff] %v793
      %v800 = vld [vmem:[%s165 + $0x8] sm:$0xff]
      %v801 = vld [vmem:[%s165 + $0x10] sm:$0xff]
      %v802 = vld [vmem:[%s165 + $0x18] sm:$0xff]
      %v803 = vld [vmem:[%s165 + $0x20] sm:$0xff]
      %808 = vrot.lane.b32.xlu0 %v800, 110
      %v809 = vpop.permute.xlu0 %808
      %810 = vrot.lane.b32.xlu0 %v801, 110
      %v811 = vpop.permute.xlu0 %810
      %812 = vrot.lane.b32.xlu0 %v802, 110
      %v813 = vpop.permute.xlu0 %812
      %814 = vrot.lane.b32.xlu0 %v803, 110
      %v815 = vpop.permute.xlu0 %814
      %v816 = vsel %vm375, %v809, %v811
      %v817 = vsel %vm375, %v811, %v813
      %v818 = vsel %vm375, %v813, %v815
      %822 = vst [vmem:[#allocation2 + $0x270] sm:$0xff] %v816
      %823 = vst [vmem:[#allocation2 + $0x278] sm:$0xff] %v817
      %824 = vst [vmem:[#allocation2 + $0x280] sm:$0xff] %v818
      %825 = vst [vmem:[#allocation2 + $0x288] sm:$0xff] 0.0
      %826 = vst [vmem:[#allocation2 + $0x290] sm:$0xff] 0.0
      %827 = vst [vmem:[#allocation2 + $0x298] sm:$0xff] 0.0
      %828 = vst [vmem:[#allocation2 + $0x2a0] sm:$0xff] 0.0
      %829 = vst [vmem:[#allocation2 + $0x2a8] sm:$0xff] 0.0
      %830 = vst [vmem:[#allocation2 + $0x2b0] sm:$0xff] 0.0
      %831 = vst [vmem:[#allocation2 + $0x2b8] sm:$0xff] 0.0
      %832 = vst [vmem:[#allocation2 + $0x2c0] sm:$0xff] 0.0
      %833 = vst [vmem:[#allocation2 + $0x2c8] sm:$0xff] 0.0
      %834 = vst [vmem:[#allocation2 + $0x2d0] sm:$0xff] 0.0
      %835 = vst [vmem:[#allocation2 + $0x2d8] sm:$0xff] 0.0
      %836 = vst [vmem:[#allocation2 + $0x2e0] sm:$0xff] 0.0
      %837 = vst [vmem:[#allocation2 + $0x2e8] sm:$0xff] 0.0
      %838 = vst [vmem:[#allocation2 + $0x2f0] sm:$0xff] 0.0
      %839 = vst [vmem:[#allocation2 + $0x2f8] sm:$0xff] 0.0
      %v840 = vld [vmem:[%s0] sm:$0xff]
      %v841 = vld [vmem:[%s0 + $0x8] sm:$0xff]
      %v842 = vld [vmem:[%s0 + $0x10] sm:$0xff]
      %v843 = vld [vmem:[%s0 + $0x18] sm:$0xff]
      %v844 = vld [vmem:[#allocation2] sm:$0xff]
      %v845 = vld [vmem:[#allocation2 + $0x8] sm:$0xff]
      %v846 = vld [vmem:[#allocation2 + $0x10] sm:$0xff]
      %v847 = vld [vmem:[#allocation2 + $0x18] sm:$0xff]
      %v848 = vld [vmem:[#allocation2 + $0x20] sm:$0xff]
      %v849 = vld [vmem:[#allocation2 + $0x28] sm:$0xff]
      %v850 = vld [vmem:[#allocation2 + $0x30] sm:$0xff]
      %v851 = vld [vmem:[#allocation2 + $0x38] sm:$0xff]
      %v852 = vld [vmem:[#allocation2 + $0x40] sm:$0xff]
      %v853 = vld [vmem:[#allocation2 + $0x48] sm:$0xff]
      %v854 = vld [vmem:[#allocation2 + $0x50] sm:$0xff]
      %v855 = vld [vmem:[#allocation2 + $0x58] sm:$0xff]
      %v856 = vld [vmem:[#allocation2 + $0x60] sm:$0xff]
      %v857 = vld [vmem:[#allocation2 + $0x68] sm:$0xff]
      %v858 = vld [vmem:[#allocation2 + $0x70] sm:$0xff]
      %v859 = vld [vmem:[#allocation2 + $0x78] sm:$0xff]
      %v860 = vld [vmem:[#allocation2 + $0x80] sm:$0xff]
      %v861 = vld [vmem:[#allocation2 + $0x88] sm:$0xff]
      %v862 = vld [vmem:[#allocation2 + $0x90] sm:$0xff]
      %v863 = vld [vmem:[#allocation2 + $0x98] sm:$0xff]
      %v864 = vld [vmem:[#allocation2 + $0xa0] sm:$0xff]
      %v865 = vld [vmem:[#allocation2 + $0xa8] sm:$0xff]
      %v866 = vld [vmem:[#allocation2 + $0xb0] sm:$0xff]
      %v867 = vld [vmem:[#allocation2 + $0xb8] sm:$0xff]
      %v868 = vld [vmem:[#allocation2 + $0xc0] sm:$0xff]
      %v869 = vld [vmem:[#allocation2 + $0xc8] sm:$0xff]
      %v870 = vld [vmem:[#allocation2 + $0xd0] sm:$0xff]
      %v871 = vld [vmem:[#allocation2 + $0xd8] sm:$0xff]
      %v872 = vld [vmem:[#allocation2 + $0xe0] sm:$0xff]
      %v873 = vld [vmem:[#allocation2 + $0xe8] sm:$0xff]
      %v874 = vld [vmem:[#allocation2 + $0xf0] sm:$0xff]
      %v875 = vld [vmem:[#allocation2 + $0xf8] sm:$0xff]
      %v876 = vld [vmem:[#allocation2 + $0x100] sm:$0xff]
      %v877 = vld [vmem:[#allocation2 + $0x108] sm:$0xff]
      %v878 = vld [vmem:[#allocation2 + $0x110] sm:$0xff]
      %v879 = vld [vmem:[#allocation2 + $0x118] sm:$0xff]
      %v880 = vld [vmem:[#allocation2 + $0x120] sm:$0xff]
      %v881 = vld [vmem:[#allocation2 + $0x128] sm:$0xff]
      %v882 = vld [vmem:[#allocation2 + $0x130] sm:$0xff]
      %v883 = vld [vmem:[#allocation2 + $0x138] sm:$0xff]
      %v884 = vld [vmem:[#allocation2 + $0x140] sm:$0xff]
      %v885 = vld [vmem:[#allocation2 + $0x148] sm:$0xff]
      %v886 = vld [vmem:[#allocation2 + $0x150] sm:$0xff]
      %v887 = vld [vmem:[#allocation2 + $0x158] sm:$0xff]
      %v888 = vld [vmem:[#allocation2 + $0x160] sm:$0xff]
      %v889 = vld [vmem:[#allocation2 + $0x168] sm:$0xff]
      %v890 = vld [vmem:[#allocation2 + $0x170] sm:$0xff]
      %v891 = vld [vmem:[#allocation2 + $0x178] sm:$0xff]
      %v892 = vld [vmem:[#allocation2 + $0x180] sm:$0xff]
      %v893 = vld [vmem:[#allocation2 + $0x188] sm:$0xff]
      %v894 = vld [vmem:[#allocation2 + $0x190] sm:$0xff]
      %v895 = vld [vmem:[#allocation2 + $0x198] sm:$0xff]
      %v896 = vld [vmem:[#allocation2 + $0x1a0] sm:$0xff]
      %v897 = vld [vmem:[#allocation2 + $0x1a8] sm:$0xff]
      %v898 = vld [vmem:[#allocation2 + $0x1b0] sm:$0xff]
      %v899 = vld [vmem:[#allocation2 + $0x1b8] sm:$0xff]
      %v900 = vld [vmem:[#allocation2 + $0x1c0] sm:$0xff]
      %v901 = vld [vmem:[#allocation2 + $0x1c8] sm:$0xff]
      %v902 = vld [vmem:[#allocation2 + $0x1d0] sm:$0xff]
      %v903 = vld [vmem:[#allocation2 + $0x1d8] sm:$0xff]
      %v904 = vld [vmem:[#allocation2 + $0x1e0] sm:$0xff]
      %v905 = vld [vmem:[#allocation2 + $0x1e8] sm:$0xff]
      %v906 = vld [vmem:[#allocation2 + $0x1f0] sm:$0xff]
      %v907 = vld [vmem:[#allocation2 + $0x1f8] sm:$0xff]
      %v908 = vld [vmem:[#allocation2 + $0x200] sm:$0xff]
      %v909 = vld [vmem:[#allocation2 + $0x208] sm:$0xff]
      %v910 = vld [vmem:[#allocation2 + $0x210] sm:$0xff]
      %v911 = vld [vmem:[#allocation2 + $0x218] sm:$0xff]
      %v912 = vld [vmem:[#allocation2 + $0x220] sm:$0xff]
      %v913 = vld [vmem:[#allocation2 + $0x228] sm:$0xff]
      %v914 = vld [vmem:[#allocation2 + $0x230] sm:$0xff]
      %v915 = vld [vmem:[#allocation2 + $0x238] sm:$0xff]
      %v916 = vld [vmem:[#allocation2 + $0x240] sm:$0xff]
      %v917 = vld [vmem:[#allocation2 + $0x248] sm:$0xff]
      %v918 = vld [vmem:[#allocation2 + $0x250] sm:$0xff]
      %v919 = vld [vmem:[#allocation2 + $0x258] sm:$0xff]
      %v920 = vld [vmem:[#allocation2 + $0x260] sm:$0xff]
      %v921 = vld [vmem:[#allocation2 + $0x268] sm:$0xff]
      %v922 = vld [vmem:[#allocation2 + $0x270] sm:$0xff]
      %v923 = vld [vmem:[#allocation2 + $0x278] sm:$0xff]
      %v924 = vld [vmem:[#allocation2 + $0x280] sm:$0xff]
      %v925 = vld [vmem:[#allocation2 + $0x288] sm:$0xff]
      %v926 = vld [vmem:[#allocation2 + $0x290] sm:$0xff]
      %v927 = vld [vmem:[#allocation2 + $0x298] sm:$0xff]
      %v928 = vld [vmem:[#allocation2 + $0x2a0] sm:$0xff]
      %v929 = vld [vmem:[#allocation2 + $0x2a8] sm:$0xff]
      %v930 = vld [vmem:[#allocation2 + $0x2b0] sm:$0xff]
      %v931 = vld [vmem:[#allocation2 + $0x2b8] sm:$0xff]
      %v932 = vld [vmem:[#allocation2 + $0x2c0] sm:$0xff]
      %v933 = vld [vmem:[#allocation2 + $0x2c8] sm:$0xff]
      %v934 = vld [vmem:[#allocation2 + $0x2d0] sm:$0xff]
      %v935 = vld [vmem:[#allocation2 + $0x2d8] sm:$0xff]
      %v936 = vld [vmem:[#allocation2 + $0x2e0] sm:$0xff]
      %v937 = vld [vmem:[#allocation2 + $0x2e8] sm:$0xff]
      %v938 = vld [vmem:[#allocation2 + $0x2f0] sm:$0xff]
      %v939 = vld [vmem:[#allocation2 + $0x2f8] sm:$0xff]
      %v940 = vld [vmem:[%s2] sm:$0xff]
      %v941 = vld [vmem:[%s2 + $0x8] sm:$0xff]
      %943 = vset.pattern.permute.xlu0 0
      %944 = vperm.xlu0 %943, %v940
      %v945 = vpop.permute.xlu0 %944
      %948 = vset.pattern.permute.xlu0 0
      %949 = vperm.xlu0 %948, %v941
      %v950 = vpop.permute.xlu0 %949
      %952 = vmatprep.subr.mxu0 %v845
      %953 = vmatpush1.msra.mxu0 %v844
      %954 = vmatprep.subr.mxu0 %v848
      %955 = vmatpush1.msra.mxu0 %v847
      %956 = vmatprep.subr.mxu0 %v851
      %957 = vmatpush1.msra.mxu0 %v850
      %958 = vmatprep.subr.mxu0 %v854
      %959 = vmatpush1.msra.mxu0 %v853
      %960 = vmatprep.subr.mxu0 %v857
      %961 = vmatpush1.msra.mxu0 %v856
      %962 = vmatprep.subr.mxu0 %v860
      %963 = vmatpush1.msra.mxu0 %v859
      %964 = vmatprep.subr.mxu0 %v863
      %965 = vmatpush1.msra.mxu0 %v862
      %966 = vmatprep.subr.mxu0 %v866
      %967 = vmatpush1.msra.mxu0 %v865
      %968 = vmatprep.subr.mxu0 %v869
      %969 = vmatpush1.msra.mxu0 %v868
      %970 = vmatprep.subr.mxu0 %v872
      %971 = vmatpush1.msra.mxu0 %v871
      %972 = vmatprep.subr.mxu0 %v875
      %973 = vmatpush1.msra.mxu0 %v874
      %974 = vmatprep.subr.mxu0 %v878
      %975 = vmatpush1.msra.mxu0 %v877
      %976 = vmatprep.subr.mxu0 %v881
      %977 = vmatpush1.msra.mxu0 %v880
      %978 = vmatprep.subr.mxu0 %v884
      %979 = vmatpush1.msra.mxu0 %v883
      %980 = vmatprep.subr.mxu0 %v887
      %981 = vmatpush1.msra.mxu0 %v886
      %982 = vmatprep.subr.mxu0 %v890
      %983 = vmatpush1.msra.mxu0 %v889
      %984 = vmatprep.subr.mxu0 %v893
      %985 = vmatpush1.msra.mxu0 %v892
      %986 = vmatprep.subr.mxu0 %v896
      %987 = vmatpush1.msra.mxu0 %v895
      %988 = vmatprep.subr.mxu0 %v899
      %989 = vmatpush1.msra.mxu0 %v898
      %990 = vmatprep.subr.mxu0 %v902
      %991 = vmatpush1.msra.mxu0 %v901
      %992 = vmatprep.subr.mxu0 %v905
      %993 = vmatpush1.msra.mxu0 %v904
      %994 = vmatprep.subr.mxu0 %v908
      %995 = vmatpush1.msra.mxu0 %v907
      %996 = vmatprep.subr.mxu0 %v911
      %997 = vmatpush1.msra.mxu0 %v910
      %998 = vmatprep.subr.mxu0 %v914
      %999 = vmatpush1.msra.mxu0 %v913
      %1000 = vmatprep.subr.mxu0 %v917
      %1001 = vmatpush1.msra.mxu0 %v916
      %1002 = vmatprep.subr.mxu0 %v920
      %1003 = vmatpush1.msra.mxu0 %v919
      %1004 = vmatprep.subr.mxu0 %v923
      %1005 = vmatpush1.msra.mxu0 %v922
      %1006 = vmatprep.subr.mxu0 %v926
      %1007 = vmatpush1.msra.mxu0 %v925
      %1008 = vmatprep.subr.mxu0 %v929
      %1009 = vmatpush1.msra.mxu0 %v928
      %1010 = vmatprep.subr.mxu0 %v932
      %1011 = vmatpush1.msra.mxu0 %v931
      %1012 = vmatprep.subr.mxu0 %v935
      %1013 = vmatpush1.msra.mxu0 %v934
      %1014 = vmatprep.subr.mxu0 %v938
      %1015 = vmatpush1.msra.mxu0 %v937
      %1016 = vmatprep.mubr.f32.mxu0 %v841
      %1017 = vmatmul.mubr.f32.gmra.mrb[0].mxu0 %v840
      %v1018 = vpop.f32.mrb[0].mxu0
      %v1019 = vadd.f32 %v945, %v1018
      %v1020 = vpop.f32.mrb[0].mxu0
      %v1021 = vadd.f32 %v945, %v1020
      %1022 = vmatprep.mubr.f32.mxu0 %v843
      %1023 = vmatmul.mubr.f32.gmra.mrb[0].mxu0 %v842
      %v1024 = vpop.f32.mrb[0].mxu0
      %v1025 = vadd.f32 %v950, %v1024
      %v1026 = vpop.f32.mrb[0].mxu0
      %v1027 = vadd.f32 %v950, %v1026
      %1028 = vdwg.mxu0
      %1029 = vmatprep.subr.mxu0 0.0
      %1030 = vmatpush1.msra.mxu0 %v846
      %1031 = vmatprep.subr.mxu0 0.0
      %1032 = vmatpush1.msra.mxu0 %v849
      %1033 = vmatprep.subr.mxu0 0.0
      %1034 = vmatpush1.msra.mxu0 %v852
      %1035 = vmatprep.subr.mxu0 0.0
      %1036 = vmatpush1.msra.mxu0 %v855
      %1037 = vmatprep.subr.mxu0 0.0
      %1038 = vmatpush1.msra.mxu0 %v858
      %1039 = vmatprep.subr.mxu0 0.0
      %1040 = vmatpush1.msra.mxu0 %v861
      %1041 = vmatprep.subr.mxu0 0.0
      %1042 = vmatpush1.msra.mxu0 %v864
      %1043 = vmatprep.subr.mxu0 0.0
      %1044 = vmatpush1.msra.mxu0 %v867
      %1045 = vmatprep.subr.mxu0 0.0
      %1046 = vmatpush1.msra.mxu0 %v870
      %1047 = vmatprep.subr.mxu0 0.0
      %1048 = vmatpush1.msra.mxu0 %v873
      %1049 = vmatprep.subr.mxu0 0.0
      %1050 = vmatpush1.msra.mxu0 %v876
      %1051 = vmatprep.subr.mxu0 0.0
      %1052 = vmatpush1.msra.mxu0 %v879
      %1053 = vmatprep.subr.mxu0 0.0
      %1054 = vmatpush1.msra.mxu0 %v882
      %1055 = vmatprep.subr.mxu0 0.0
      %1056 = vmatpush1.msra.mxu0 %v885
      %1057 = vmatprep.subr.mxu0 0.0
      %1058 = vmatpush1.msra.mxu0 %v888
      %1059 = vmatprep.subr.mxu0 0.0
      %1060 = vmatpush1.msra.mxu0 %v891
      %1061 = vmatprep.subr.mxu0 0.0
      %1062 = vmatpush1.msra.mxu0 %v894
      %1063 = vmatprep.subr.mxu0 0.0
      %1064 = vmatpush1.msra.mxu0 %v897
      %1065 = vmatprep.subr.mxu0 0.0
      %1066 = vmatpush1.msra.mxu0 %v900
      %1067 = vmatprep.subr.mxu0 0.0
      %1068 = vmatpush1.msra.mxu0 %v903
      %1069 = vmatprep.subr.mxu0 0.0
      %1070 = vmatpush1.msra.mxu0 %v906
      %1071 = vmatprep.subr.mxu0 0.0
      %1072 = vmatpush1.msra.mxu0 %v909
      %1073 = vmatprep.subr.mxu0 0.0
      %1074 = vmatpush1.msra.mxu0 %v912
      %1075 = vmatprep.subr.mxu0 0.0
      %1076 = vmatpush1.msra.mxu0 %v915
      %1077 = vmatprep.subr.mxu0 0.0
      %1078 = vmatpush1.msra.mxu0 %v918
      %1079 = vmatprep.subr.mxu0 0.0
      %1080 = vmatpush1.msra.mxu0 %v921
      %1081 = vmatprep.subr.mxu0 0.0
      %1082 = vmatpush1.msra.mxu0 %v924
      %1083 = vmatprep.subr.mxu0 0.0
      %1084 = vmatpush1.msra.mxu0 %v927
      %1085 = vmatprep.subr.mxu0 0.0
      %1086 = vmatpush1.msra.mxu0 %v930
      %1087 = vmatprep.subr.mxu0 0.0
      %1088 = vmatpush1.msra.mxu0 %v933
      %1089 = vmatprep.subr.mxu0 0.0
      %1090 = vmatpush1.msra.mxu0 %v936
      %1091 = vmatprep.subr.mxu0 0.0
      %1092 = vmatpush1.msra.mxu0 %v939
      %1093 = vmatprep.mubr.f32.mxu0 %v841
      %1094 = vmatmul.mubr.f32.gmra.mrb[0].mxu0 %v840
      %v1095 = vpop.f32.mrb[0].mxu0
      %v1096 = vadd.f32 %v945, %v1095
      %v1097 = vpop.f32.mrb[0].mxu0
      %1098 = vmatprep.mubr.f32.mxu0 %v843
      %1099 = vmatmul.mubr.f32.gmra.mrb[0].mxu0 %v842
      %v1100 = vpop.f32.mrb[0].mxu0
      %v1101 = vadd.f32 %v950, %v1100
      %v1102 = vpop.f32.mrb[0].mxu0
      %1103 = vdwg.mxu0
      %v1104 = vmax.f32 %v1019, 0.0
      %v1105 = vmax.f32 %v1021, 0.0
      %v1106 = vmax.f32 %v1096, 0.0
      %v1107 = vmax.f32 %v1025, 0.0
      %v1108 = vmax.f32 %v1027, 0.0
      %v1109 = vmax.f32 %v1101, 0.0
      %v1110 = vmul.f32 %v1104, 0.5
      %v1111 = vmul.f32 %v1105, 0.5
      %v1112 = vmul.f32 %v1106, 0.5
      %v1113 = vmul.f32 %v1107, 0.5
      %v1114 = vmul.f32 %v1108, 0.5
      %v1115 = vmul.f32 %v1109, 0.5
      %v1116 = vmul.f32 %v1104, 0.70710677
      %v1117 = vmul.f32 %v1105, 0.70710677
      %v1118 = vmul.f32 %v1106, 0.70710677
      %v1119 = vmul.f32 %v1107, 0.70710677
      %v1120 = vmul.f32 %v1108, 0.70710677
      %v1121 = vmul.f32 %v1109, 0.70710677
      %v1122 = verf.f32.pop %v1116
      %v1123 = verf.f32.pop %v1117
      %v1124 = verf.f32.pop %v1118
      %v1125 = verf.f32.pop %v1119
      %v1126 = verf.f32.pop %v1120
      %v1127 = verf.f32.pop %v1121
      %v1128 = vadd.f32 %v1122, 1.0
      %v1129 = vadd.f32 %v1123, 1.0
      %v1130 = vadd.f32 %v1124, 1.0
      %v1131 = vadd.f32 %v1125, 1.0
      %v1132 = vadd.f32 %v1126, 1.0
      %v1133 = vadd.f32 %v1127, 1.0
      %v1134 = vmul.f32 %v1110, %v1128
      %v1135 = vmul.f32 %v1111, %v1129
      %v1136 = vmul.f32 %v1112, %v1130
      %v1137 = vmul.f32 %v1113, %v1131
      %v1138 = vmul.f32 %v1114, %v1132
      %v1139 = vmul.f32 %v1115, %v1133
      %v1140 = vmul.f32 %v1134, 0.5
      %v1141 = vmul.f32 %v1135, 0.5
      %v1142 = vmul.f32 %v1136, 0.5
      %v1143 = vmul.f32 %v1137, 0.5
      %v1144 = vmul.f32 %v1138, 0.5
      %v1145 = vmul.f32 %v1139, 0.5
      %v1146 = vtanh.pop %v1140
      %v1147 = vtanh.pop %v1141
      %v1148 = vtanh.pop %v1142
      %v1149 = vtanh.pop %v1143
      %v1150 = vtanh.pop %v1144
      %v1151 = vtanh.pop %v1145
      %v1152 = vadd.f32 %v1146, 1.0
      %v1153 = vadd.f32 %v1147, 1.0
      %v1154 = vadd.f32 %v1148, 1.0
      %v1155 = vadd.f32 %v1149, 1.0
      %v1156 = vadd.f32 %v1150, 1.0
      %v1157 = vadd.f32 %v1151, 1.0
      %v1158 = vmul.f32 %v1152, 0.5
      %v1159 = vmul.f32 %v1153, 0.5
      %v1160 = vmul.f32 %v1154, 0.5
      %v1161 = vmul.f32 %v1155, 0.5
      %v1162 = vmul.f32 %v1156, 0.5
      %v1163 = vmul.f32 %v1157, 0.5
      %1164 = vset.pattern.permute.xlu0 1
      %1165 = vperm.xlu0 %1164, %v940
      %v1166 = vpop.permute.xlu0 %1165
      %1168 = vset.pattern.permute.xlu0 1
      %1169 = vperm.xlu0 %1168, %v941
      %v1170 = vpop.permute.xlu0 %1169
      %v1172 = vadd.f32 %v1158, %v1166
      %v1173 = vadd.f32 %v1159, %v1166
      %v1174 = vadd.f32 %v1160, %v1166
      %v1175 = vadd.f32 %v1161, %v1170
      %v1176 = vadd.f32 %v1162, %v1170
      %v1177 = vadd.f32 %v1163, %v1170
      %1178 = vst [vmem:[%s170] sm:$0xff] %v1172
      %1179 = vst [vmem:[%s170 + $0x8] sm:$0xff] %v1173
      %1180 = vst [vmem:[%s170 + $0x10] sm:$0xff] %v1174
      %1181 = vst [vmem:[%s170 + $0x18] sm:$0xff] %v1175
      %1182 = vst [vmem:[%s170 + $0x20] sm:$0xff] %v1176
      %1183 = vst [vmem:[%s170 + $0x28] sm:$0xff] %v1177
      %p1184 = scmp.lt.s32.totalorder %s14, 1
      %s1185 = scalar_select %p1184, %s14, 1
      %s1186 = smul.addr %s1185, 6
      %s1187 = smul.addr %s1186, 8
      %s1188 = scalar_lea.vmem %s3, %s1187
      // Predicated region
      $region33: #{conv3d_act_bias.1} parent=31 // pred_check
        %p1189 = pneg %p100
      $region34: #{conv3d_act_bias.1} parent=31 // pred_check_branch
        %1191 = sbr.rel (%p1189) target = $region36
      $region35: #{conv3d_act_bias.1} parent=31 // pred_region
        _
      $region36: #{conv3d_act_bias.1} parent=31 // pred_fallthru
        _
    $region32: #{conv3d_act_bias.1} parent=5 // pred_fallthru
      _
    %p1192 = scmp.le.s32.totalorder 2, %s9
    // Predicated region
    $region37: #{conv3d_act_bias.1} parent=5 // pred_check
      %p1193 = pneg %p1192
    $region38: #{conv3d_act_bias.1} parent=5 // pred_check_branch
      %1195 = sbr.rel (%p1193) target = $region40
    $region39: #{conv3d_act_bias.1} parent=5 // pred_region
      %s1196 = ssub.s32 %s9, 2
      // Predicated region
      $region41: #{conv3d_act_bias.1} parent=39 // pred_check
        %p1197 = pneg %p106
      $region42: #{conv3d_act_bias.1} parent=39 // pred_check_branch
        %1199 = sbr.rel (%p1197) target = $region44
      $region43: #{conv3d_act_bias.1} parent=39 // pred_region
        %p1200 = scmp.lt.s32.totalorder %s15, 1
        %s1201 = scalar_select %p1200, %s15, 1
        %s1202 = smul.addr %s1201, 6
        %s1203 = smul.addr %s1202, 8
        %s1204 = scalar_lea.vmem %s3, %s1203
      $region44: #{conv3d_act_bias.1} parent=39 // pred_fallthru
        _
    $region40: #{conv3d_act_bias.1} parent=5 // pred_fallthru
      _
  $region6: #{conv3d_act_bias.1} parent=0 // loop_footer
    %s13 = sadd.s32 1, %s9
  $region7: #{conv3d_act_bias.1} parent=0 // loop_footer_branch
    %8 = sbr.rel target = $region3
  $region8: #{conv3d_act_bias.1} parent=0 // loop_exit
    _

</llo_original>
